<compile_context>
chip_gen: v7x
topology: tpu7x:2x2x1
jax: 0.10.0
libtpu: 0.0.40
codegen_flags: <defaults>
</compile_context>

<pallas_src>
import math

import jax
import jax.numpy as jnp
from jax.experimental import pallas as pl
from jax.experimental.pallas import tpu as pltpu


def _make_kernel(num_hidden):
    # ref order: x_i, x_j, edge_row, scal(SMEM), (W, b) * num_hidden, w_eff_row, out
    def kernel(*refs):
        x_i_ref, x_j_ref, edge_ref, scal_ref = refs[0:4]
        wb_refs = refs[4:4 + 2 * num_hidden]
        w_eff_ref = refs[4 + 2 * num_hidden]
        o_ref = refs[-1]

        # --- node branch: elementwise product then MLP (all but last layer) ---
        y = x_i_ref[...].astype(jnp.float32) * x_j_ref[...].astype(jnp.float32)
        for l in range(num_hidden):
            w = wb_refs[2 * l][...]
            b = wb_refs[2 * l + 1][...]
            y = jnp.dot(y, w, preferred_element_type=jnp.float32) + b
            y = jnp.maximum(y, 0.0)
            # dropout: inference mode -> identity
            # TODO(synk): stochastic dropout (training=True) not implemented.

        # --- fused last Linear(hid,1) + edge Linear(1,1) + concat Linear(2,1) ---
        # z = w_eff . y^T  (contraction over hidden, q.k^T-style) -> [1, block_b]
        z = jax.lax.dot_general(
            w_eff_ref[...], y,
            dimension_numbers=(((1,), (1,)), ((), ())),
            preferred_element_type=jnp.float32,
        )
        edge = edge_ref[...].astype(jnp.float32)          # [1, block_b], lane-dense
        z = z + edge * scal_ref[0] + scal_ref[1]
        o_ref[...] = jax.nn.sigmoid(z).astype(o_ref.dtype)

    return kernel


def link_predictor_forward(x_i, x_j, edge_info, params, *, block_b=512):
    B, in_dim = x_i.shape
    layers = params["layers"]
    num_layers = len(layers)
    out_dim = layers[-1][0].shape[1]
    assert out_dim == 1, "concat Linear(2,1) requires out_dim == 1"

    # Pad the batch up to a multiple of block_b (output is sliced back below).
    nb = pl.cdiv(B, block_b)
    padded_B = nb * block_b
    pad = padded_B - B
    if pad:
        x_i = jnp.pad(x_i, ((0, pad), (0, 0)))
        x_j = jnp.pad(x_j, ((0, pad), (0, 0)))
        edge_info = jnp.pad(edge_info, ((0, pad), (0, 0)))
    edge_row = edge_info.reshape(1, padded_B)   # contiguous -> free reshape

    # Host-side folding of last layer + edge linear + concat linear.
    w_last, b_last = layers[-1]
    we, be = params["edge"]
    wc, bc = params["concat"]
    w_eff = (w_last[:, 0] * wc[0, 0]).reshape(1, -1).astype(jnp.float32)  # [1, hid]
    edge_scale = we[0, 0] * wc[1, 0]
    b_eff = b_last[0, 0] * wc[0, 0] + be[0, 0] * wc[1, 0] + bc[0, 0]
    scal = jnp.stack([edge_scale, b_eff]).astype(jnp.float32)             # (2,)

    operands = [x_i, x_j, edge_row, scal]
    in_specs = [
        pl.BlockSpec((block_b, in_dim), lambda i: (i, 0)),
        pl.BlockSpec((block_b, in_dim), lambda i: (i, 0)),
        pl.BlockSpec((1, block_b), lambda i: (0, i)),
        pl.BlockSpec(memory_space=pltpu.MemorySpace.SMEM),
    ]
    for (w, b) in layers[:-1]:
        operands += [w, b]
        in_specs += [pl.BlockSpec(w.shape, lambda i: (0, 0)),
                     pl.BlockSpec(b.shape, lambda i: (0, 0))]
    operands.append(w_eff)
    in_specs.append(pl.BlockSpec(w_eff.shape, lambda i: (0, 0)))

    kernel = _make_kernel(num_layers - 1)
    out = pl.pallas_call(
        kernel,
        out_shape=jax.ShapeDtypeStruct((1, padded_B), jnp.float32),
        grid_spec=pltpu.PrefetchScalarGridSpec(
            num_scalar_prefetch=0,
            grid=(nb,),
            in_specs=in_specs,
            out_specs=pl.BlockSpec((1, block_b), lambda i: (0, i)),
        ),
        compiler_params=pltpu.CompilerParams(
            dimension_semantics=("parallel",)),
    )(*operands)
    return out[0, :B].reshape(B, 1)


def _init_linear(key, fan_in, fan_out):
    # PyTorch nn.Linear default init: U(-1/sqrt(fan_in), 1/sqrt(fan_in))
    k = 1.0 / math.sqrt(fan_in)
    kw, kb = jax.random.split(key)
    w = jax.random.uniform(kw, (fan_in, fan_out), jnp.float32, -k, k)
    b = jax.random.uniform(kb, (1, fan_out), jnp.float32, -k, k)
    return w, b


def init_params(key, in_dim, hidden_dim, out_dim, num_layers):
    keys = jax.random.split(key, num_layers + 2)
    layers = []
    dims = [in_dim] + [hidden_dim] * (num_layers - 1) + [out_dim]
    for l in range(num_layers):
        layers.append(_init_linear(keys[l], dims[l], dims[l + 1]))
    edge = _init_linear(keys[num_layers], 1, 1)
    concat = _init_linear(keys[num_layers + 1], 2, 1)
    return {"layers": layers, "edge": edge, "concat": concat}


def reference_forward(x_i, x_j, edge_info, params):
    # Unfused reference (mirrors the PyTorch forward in inference mode).
    we, be = params["edge"]
    edge = edge_info @ we + be
    y = x_i * x_j
    n = len(params["layers"])
    for l, (w, b) in enumerate(params["layers"]):
        y = y @ w + b
        if l < n - 1:
            y = jnp.maximum(y, 0.0)
    y = jnp.concatenate([y, edge], axis=1)
    wc, bc = params["concat"]
    y = y @ wc + bc
    return jax.nn.sigmoid(y)


if __name__ == "__main__":
    B, IN_DIM, HIDDEN, OUT_DIM, NUM_LAYERS = 200, 32, 64, 1, 3

    root = jax.random.PRNGKey(0)
    k_xi, k_xj, k_e, k_p = jax.random.split(root, 4)
    x_i = jax.random.normal(k_xi, (B, IN_DIM), jnp.float32)
    x_j = jax.random.normal(k_xj, (B, IN_DIM), jnp.float32)
    edge_info = jax.random.normal(k_e, (B, 1), jnp.float32)
    params = init_params(k_p, IN_DIM, HIDDEN, OUT_DIM, NUM_LAYERS)

    out = link_predictor_forward(x_i, x_j, edge_info, params, block_b=512)
    out = jax.block_until_ready(out)

    ref = reference_forward(x_i, x_j, edge_info, params)
    assert out.shape == (B, 1)
    assert jnp.allclose(out, ref, atol=1e-5, rtol=1e-5), "mismatch vs reference"
    print("KERNEL_OK")
</pallas_src>

<mosaic_0001>
module attributes {stable_mosaic.version = 11 : i64} {
  func.func @kernel(%arg0: i32, %arg1: memref<512x32xf32, #tpu.memory_space<vmem>>, %arg2: memref<512x32xf32, #tpu.memory_space<vmem>>, %arg3: memref<1x512xf32, #tpu.memory_space<vmem>>, %arg4: memref<2xf32, #tpu.memory_space<smem>>, %arg5: memref<32x64xf32, #tpu.memory_space<vmem>>, %arg6: memref<1x64xf32, #tpu.memory_space<vmem>>, %arg7: memref<64x64xf32, #tpu.memory_space<vmem>>, %arg8: memref<1x64xf32, #tpu.memory_space<vmem>>, %arg9: memref<1x64xf32, #tpu.memory_space<vmem>>, %arg10: memref<1x512xf32, #tpu.memory_space<vmem>>) attributes {dimension_semantics = [#tpu.dimension_semantics<parallel>], iteration_bounds = array<i64: 1>, scalar_prefetch = 0 : i64, scratch_operands = 0 : i64, tpu.core_type = #tpu.core_type<tc>, window_params = [{transform_indices = @transform_0, window_bounds = array<i64: 512, 32>}, {transform_indices = @transform_1, window_bounds = array<i64: 512, 32>}, {transform_indices = @transform_2, window_bounds = array<i64: 1, 512>}, {transform_indices = @transform_3, window_bounds = array<i64: 2>}, {pipeline_mode = #tpu.pipeline_mode<synchronous>, transform_indices = @transform_4, window_bounds = array<i64: 32, 64>}, {pipeline_mode = #tpu.pipeline_mode<synchronous>, transform_indices = @transform_5, window_bounds = array<i64: 1, 64>}, {pipeline_mode = #tpu.pipeline_mode<synchronous>, transform_indices = @transform_6, window_bounds = array<i64: 64, 64>}, {pipeline_mode = #tpu.pipeline_mode<synchronous>, transform_indices = @transform_7, window_bounds = array<i64: 1, 64>}, {pipeline_mode = #tpu.pipeline_mode<synchronous>, transform_indices = @transform_8, window_bounds = array<i64: 1, 64>}, {transform_indices = @transform_9, window_bounds = array<i64: 1, 512>}]} {
    %c0 = arith.constant 0 : index
    %c0_0 = arith.constant 0 : index
    %0 = vector.load %arg1[%c0, %c0_0] : memref<512x32xf32, #tpu.memory_space<vmem>>, vector<512x32xf32>
    %c0_1 = arith.constant 0 : index
    %c0_2 = arith.constant 0 : index
    %1 = vector.load %arg2[%c0_1, %c0_2] : memref<512x32xf32, #tpu.memory_space<vmem>>, vector<512x32xf32>
    %2 = arith.mulf %0, %1 : vector<512x32xf32>
    %c0_3 = arith.constant 0 : index
    %c0_4 = arith.constant 0 : index
    %3 = vector.load %arg5[%c0_3, %c0_4] : memref<32x64xf32, #tpu.memory_space<vmem>>, vector<32x64xf32>
    %c0_5 = arith.constant 0 : index
    %c0_6 = arith.constant 0 : index
    %4 = vector.load %arg6[%c0_5, %c0_6] : memref<1x64xf32, #tpu.memory_space<vmem>>, vector<1x64xf32>
    %cst = arith.constant dense<0.000000e+00> : vector<512x64xf32>
    %5 = tpu.matmul %2, %3, %cst {dimension_numbers = #tpu.dot_dimension_numbers<[1], [0], [0], [1], [0, 0, 1, 1], [], []>} : vector<512x32xf32>, vector<32x64xf32>, vector<512x64xf32> -> vector<512x64xf32>
    %6 = vector.broadcast %4 : vector<1x64xf32> to vector<512x64xf32>
    %7 = arith.addf %5, %6 : vector<512x64xf32>
    %cst_7 = arith.constant 0.000000e+00 : f32
    %8 = vector.broadcast %cst_7 : f32 to vector<512x64xf32>
    %9 = arith.maximumf %7, %8 : vector<512x64xf32>
    %c0_8 = arith.constant 0 : index
    %c0_9 = arith.constant 0 : index
    %10 = vector.load %arg7[%c0_8, %c0_9] : memref<64x64xf32, #tpu.memory_space<vmem>>, vector<64x64xf32>
    %c0_10 = arith.constant 0 : index
    %c0_11 = arith.constant 0 : index
    %11 = vector.load %arg8[%c0_10, %c0_11] : memref<1x64xf32, #tpu.memory_space<vmem>>, vector<1x64xf32>
    %cst_12 = arith.constant dense<0.000000e+00> : vector<512x64xf32>
    %12 = tpu.matmul %9, %10, %cst_12 {dimension_numbers = #tpu.dot_dimension_numbers<[1], [0], [0], [1], [0, 0, 1, 1], [], []>} : vector<512x64xf32>, vector<64x64xf32>, vector<512x64xf32> -> vector<512x64xf32>
    %13 = vector.broadcast %11 : vector<1x64xf32> to vector<512x64xf32>
    %14 = arith.addf %12, %13 : vector<512x64xf32>
    %cst_13 = arith.constant 0.000000e+00 : f32
    %15 = vector.broadcast %cst_13 : f32 to vector<512x64xf32>
    %16 = arith.maximumf %14, %15 : vector<512x64xf32>
    %c0_14 = arith.constant 0 : index
    %c0_15 = arith.constant 0 : index
    %17 = vector.load %arg9[%c0_14, %c0_15] : memref<1x64xf32, #tpu.memory_space<vmem>>, vector<1x64xf32>
    %cst_16 = arith.constant dense<0.000000e+00> : vector<1x512xf32>
    %18 = tpu.matmul %17, %16, %cst_16 {dimension_numbers = #tpu.dot_dimension_numbers<[1], [1], [0], [0], [0, 0, 1, 0], [], []>} : vector<1x64xf32>, vector<512x64xf32>, vector<1x512xf32> -> vector<1x512xf32>
    %c0_17 = arith.constant 0 : index
    %c0_18 = arith.constant 0 : index
    %19 = vector.load %arg3[%c0_17, %c0_18] : memref<1x512xf32, #tpu.memory_space<vmem>>, vector<1x512xf32>
    %c0_19 = arith.constant 0 : index
    %20 = memref.load %arg4[%c0_19] : memref<2xf32, #tpu.memory_space<smem>>
    %21 = vector.broadcast %20 : f32 to vector<1x512xf32>
    %22 = arith.mulf %19, %21 : vector<1x512xf32>
    %23 = arith.addf %18, %22 : vector<1x512xf32>
    %c1 = arith.constant 1 : index
    %24 = memref.load %arg4[%c1] : memref<2xf32, #tpu.memory_space<smem>>
    %25 = vector.broadcast %24 : f32 to vector<1x512xf32>
    %26 = arith.addf %23, %25 : vector<1x512xf32>
    %27 = arith.negf %26 : vector<1x512xf32>
    %28 = math.exp %27 : vector<1x512xf32>
    %cst_20 = arith.constant 1.000000e+00 : f32
    %29 = vector.broadcast %cst_20 : f32 to vector<1x512xf32>
    %30 = arith.addf %29, %28 : vector<1x512xf32>
    %31 = arith.divf %29, %30 : vector<1x512xf32>
    %c0_21 = arith.constant 0 : index
    %c0_22 = arith.constant 0 : index
    %32 = vector.load %arg10[%c0_21, %c0_22] : memref<1x512xf32, #tpu.memory_space<vmem>>, vector<1x512xf32>
    tpu.vector_store %arg10[%c0_21, %c0_22], %31 {strides = array<i32>} : memref<1x512xf32, #tpu.memory_space<vmem>>, vector<1x512xf32>,
    return
  }
  func.func @transform_0(%arg0: i32) -> (i32, i32) {
    %c0_i32 = arith.constant 0 : i32
    %c0_i32_0 = arith.constant 0 : i32
    return %arg0, %c0_i32 : i32, i32
  }
  func.func @transform_1(%arg0: i32) -> (i32, i32) {
    %c0_i32 = arith.constant 0 : i32
    %c0_i32_0 = arith.constant 0 : i32
    return %arg0, %c0_i32 : i32, i32
  }
  func.func @transform_2(%arg0: i32) -> (i32, i32) {
    %c0_i32 = arith.constant 0 : i32
    %c0_i32_0 = arith.constant 0 : i32
    return %c0_i32, %arg0 : i32, i32
  }
  func.func @transform_3(%arg0: i32) -> i32 {
    %c0_i32 = arith.constant 0 : i32
    %c0_i32_0 = arith.constant 0 : i32
    return %c0_i32 : i32
  }
  func.func @transform_4(%arg0: i32) -> (i32, i32) {
    %c0_i32 = arith.constant 0 : i32
    %c0_i32_0 = arith.constant 0 : i32
    %c0_i32_1 = arith.constant 0 : i32
    return %c0_i32, %c0_i32_0 : i32, i32
  }
  func.func @transform_5(%arg0: i32) -> (i32, i32) {
    %c0_i32 = arith.constant 0 : i32
    %c0_i32_0 = arith.constant 0 : i32
    %c0_i32_1 = arith.constant 0 : i32
    return %c0_i32, %c0_i32_0 : i32, i32
  }
  func.func @transform_6(%arg0: i32) -> (i32, i32) {
    %c0_i32 = arith.constant 0 : i32
    %c0_i32_0 = arith.constant 0 : i32
    %c0_i32_1 = arith.constant 0 : i32
    return %c0_i32, %c0_i32_0 : i32, i32
  }
  func.func @transform_7(%arg0: i32) -> (i32, i32) {
    %c0_i32 = arith.constant 0 : i32
    %c0_i32_0 = arith.constant 0 : i32
    %c0_i32_1 = arith.constant 0 : i32
    return %c0_i32, %c0_i32_0 : i32, i32
  }
  func.func @transform_8(%arg0: i32) -> (i32, i32) {
    %c0_i32 = arith.constant 0 : i32
    %c0_i32_0 = arith.constant 0 : i32
    %c0_i32_1 = arith.constant 0 : i32
    return %c0_i32, %c0_i32_0 : i32, i32
  }
  func.func @transform_9(%arg0: i32) -> (i32, i32) {
    %c0_i32 = arith.constant 0 : i32
    %c0_i32_0 = arith.constant 0 : i32
    return %c0_i32, %arg0 : i32, i32
  }
}

</mosaic_0001>

<llo_original>
// kernel: tpu_custom_call.1
$region0: #{tpu_custom_call.1}
  #allocation0 [shape = 'u32[]', space=smem, size = 0x4, offset = 0x4, fixed_abs, tag = 'smem constant byte address 0x4 - core index']
  #allocation1 [shape = 'u32[144,128]{1,0:T(1,128)}', space=vmem, size = 0x12000, scoped, tag = 'internal scratch']
  %s0 = inlined_call_operand.vmem [shape: f32[512,32], index: 0, kind: input, shape index: {}]
  %s1 = inlined_call_operand.vmem [shape: f32[512,32], index: 1, kind: input, shape index: {}]
  %s2 = inlined_call_operand.vmem [shape: f32[1,512], index: 2, kind: input, shape index: {}]
  %s3 = inlined_call_operand.vmem [shape: f32[2], index: 3, kind: input, shape index: {}]
  %s4 = inlined_call_operand.vmem [shape: f32[32,64], index: 4, kind: input, shape index: {}]
  %s5 = inlined_call_operand.vmem [shape: f32[1,64], index: 5, kind: input, shape index: {}]
  %s6 = inlined_call_operand.vmem [shape: f32[64,64], index: 6, kind: input, shape index: {}]
  %s7 = inlined_call_operand.vmem [shape: f32[1,64], index: 7, kind: input, shape index: {}]
  %s8 = inlined_call_operand.vmem [shape: f32[1,64], index: 8, kind: input, shape index: {}]
  %s9 = inlined_call_operand.hbm [shape: f32[1,512], index: 9, kind: output, shape index: {}]
  %s10 = sld [smem:[#allocation0]]
  $region50: #{tpu_custom_call.1} parent=0
    _
  %s12 = ssub.s32 1, %s10
  %s13 = scalar_select 0, %s12, %s10
  $region1: #{tpu_custom_call.1} parent=0
    #allocation2 [shape = 'u8[512]{0}', space=smem, size = 0x200, scoped, tag = 'input window, operand 3, single buffered']
    #allocation3 [shape = 's32[1]{0}', space=sflag, size = 0x4, scoped, tag = 'scoped memory for tpu_custom_call.1']
    #allocation4 [shape = 's32[1]{0}', space=sflag, size = 0x4, scoped, tag = 'scoped memory for tpu_custom_call.1']
    #allocation5 [shape = 'u8[2048]{0}', space=vmem, size = 0x800, scoped, tag = 'output window, operand 0, single buffered']
    %14 = vsyncpa [#allocation4], 0
    %15 = vsyncpa [#allocation3], 0
    // Predicated region
    $region2: #{tpu_custom_call.1} parent=1 // pred_check
      _
    $region3: #{tpu_custom_call.1} parent=1 // pred_check_branch
      %17 = sbr.rel (0) target = $region5
    $region4: #{tpu_custom_call.1} parent=1 // pred_region
      _
    $region5: #{tpu_custom_call.1} parent=1 // pred_fallthru
      _
    // Predicated region
    $region6: #{tpu_custom_call.1} parent=1 // pred_check
      _
    $region7: #{tpu_custom_call.1} parent=1 // pred_check_branch
      %19 = sbr.rel (0) target = $region9
    $region8: #{tpu_custom_call.1} parent=1 // pred_region
      _
    $region9: #{tpu_custom_call.1} parent=1 // pred_fallthru
      _
    // Predicated region
    $region10: #{tpu_custom_call.1} parent=1 // pred_check
      _
    $region11: #{tpu_custom_call.1} parent=1 // pred_check_branch
      %21 = sbr.rel (0) target = $region13
    $region12: #{tpu_custom_call.1} parent=1 // pred_region
      _
    $region13: #{tpu_custom_call.1} parent=1 // pred_fallthru
      _
    // Predicated region
    $region14: #{tpu_custom_call.1} parent=1 // pred_check
      _
    $region15: #{tpu_custom_call.1} parent=1 // pred_check_branch
      %23 = sbr.rel (0) target = $region17
    $region16: #{tpu_custom_call.1} parent=1 // pred_region
      %s25 = ssub.s32 16, 16
      %26 = vsyncadd [#allocation4], %s25
      %s28 = sshll.u32 %s3, 4
      %s29 = int_to_ptr.vmem [resolvable:$true] %s28
      %31 = dma.vmem_to_smem %s29, 16, [#allocation2], [#allocation4]
    $region17: #{tpu_custom_call.1} parent=1 // pred_fallthru
      _
    // Predicated region
    $region18: #{tpu_custom_call.1} parent=1 // pred_check
      _
    $region19: #{tpu_custom_call.1} parent=1 // pred_check_branch
      %33 = sbr.rel (0) target = $region21
    $region20: #{tpu_custom_call.1} parent=1 // pred_region
      _
    $region21: #{tpu_custom_call.1} parent=1 // pred_fallthru
      _
    // Predicated region
    $region22: #{tpu_custom_call.1} parent=1 // pred_check
      _
    $region23: #{tpu_custom_call.1} parent=1 // pred_check_branch
      %35 = sbr.rel (0) target = $region25
    $region24: #{tpu_custom_call.1} parent=1 // pred_region
      _
    $region25: #{tpu_custom_call.1} parent=1 // pred_fallthru
      _
    // Predicated region
    $region26: #{tpu_custom_call.1} parent=1 // pred_check
      _
    $region27: #{tpu_custom_call.1} parent=1 // pred_check_branch
      %37 = sbr.rel (0) target = $region29
    $region28: #{tpu_custom_call.1} parent=1 // pred_region
      _
    $region29: #{tpu_custom_call.1} parent=1 // pred_fallthru
      _
    // Predicated region
    $region30: #{tpu_custom_call.1} parent=1 // pred_check
      _
    $region31: #{tpu_custom_call.1} parent=1 // pred_check_branch
      %39 = sbr.rel (0) target = $region33
    $region32: #{tpu_custom_call.1} parent=1 // pred_region
      _
    $region33: #{tpu_custom_call.1} parent=1 // pred_fallthru
      _
    // Predicated region
    $region34: #{tpu_custom_call.1} parent=1 // pred_check
      _
    $region35: #{tpu_custom_call.1} parent=1 // pred_check_branch
      %41 = sbr.rel (0) target = $region37
    $region36: #{tpu_custom_call.1} parent=1 // pred_region
      _
    $region37: #{tpu_custom_call.1} parent=1 // pred_fallthru
      _
    // Predicated region
    $region38: #{tpu_custom_call.1} parent=1 // pred_check
      _
    $region39: #{tpu_custom_call.1} parent=1 // pred_check_branch
      %43 = sbr.rel (0) target = $region41
    $region40: #{tpu_custom_call.1} parent=1 // pred_region
      %44 = dma.done [#allocation4], 16
    $region41: #{tpu_custom_call.1} parent=1 // pred_fallthru
      _
    %45 = sfence
    %v46 = vld [vmem:[%s0] sm:$0xff]
    %v47 = vld [vmem:[%s0 + $0x8] sm:$0xff]
    %v48 = vld [vmem:[%s0 + $0x10] sm:$0xff]
    %v49 = vld [vmem:[%s0 + $0x18] sm:$0xff]
    %v50 = vld [vmem:[%s0 + $0x20] sm:$0xff]
    %v51 = vld [vmem:[%s0 + $0x28] sm:$0xff]
    %v52 = vld [vmem:[%s0 + $0x30] sm:$0xff]
    %v53 = vld [vmem:[%s0 + $0x38] sm:$0xff]
    %v54 = vld [vmem:[%s0 + $0x40] sm:$0xff]
    %v55 = vld [vmem:[%s0 + $0x48] sm:$0xff]
    %v56 = vld [vmem:[%s0 + $0x50] sm:$0xff]
    %v57 = vld [vmem:[%s0 + $0x58] sm:$0xff]
    %v58 = vld [vmem:[%s0 + $0x60] sm:$0xff]
    %v59 = vld [vmem:[%s0 + $0x68] sm:$0xff]
    %v60 = vld [vmem:[%s0 + $0x70] sm:$0xff]
    %v61 = vld [vmem:[%s0 + $0x78] sm:$0xff]
    %v62 = vld [vmem:[%s0 + $0x80] sm:$0xff]
    %v63 = vld [vmem:[%s0 + $0x88] sm:$0xff]
    %v64 = vld [vmem:[%s0 + $0x90] sm:$0xff]
    %v65 = vld [vmem:[%s0 + $0x98] sm:$0xff]
    %v66 = vld [vmem:[%s0 + $0xa0] sm:$0xff]
    %v67 = vld [vmem:[%s0 + $0xa8] sm:$0xff]
    %v68 = vld [vmem:[%s0 + $0xb0] sm:$0xff]
    %v69 = vld [vmem:[%s0 + $0xb8] sm:$0xff]
    %v70 = vld [vmem:[%s0 + $0xc0] sm:$0xff]
    %v71 = vld [vmem:[%s0 + $0xc8] sm:$0xff]
    %v72 = vld [vmem:[%s0 + $0xd0] sm:$0xff]
    %v73 = vld [vmem:[%s0 + $0xd8] sm:$0xff]
    %v74 = vld [vmem:[%s0 + $0xe0] sm:$0xff]
    %v75 = vld [vmem:[%s0 + $0xe8] sm:$0xff]
    %v76 = vld [vmem:[%s0 + $0xf0] sm:$0xff]
    %v77 = vld [vmem:[%s0 + $0xf8] sm:$0xff]
    %v78 = vld [vmem:[%s0 + $0x100] sm:$0xff]
    %v79 = vld [vmem:[%s0 + $0x108] sm:$0xff]
    %v80 = vld [vmem:[%s0 + $0x110] sm:$0xff]
    %v81 = vld [vmem:[%s0 + $0x118] sm:$0xff]
    %v82 = vld [vmem:[%s0 + $0x120] sm:$0xff]
    %v83 = vld [vmem:[%s0 + $0x128] sm:$0xff]
    %v84 = vld [vmem:[%s0 + $0x130] sm:$0xff]
    %v85 = vld [vmem:[%s0 + $0x138] sm:$0xff]
    %v86 = vld [vmem:[%s0 + $0x140] sm:$0xff]
    %v87 = vld [vmem:[%s0 + $0x148] sm:$0xff]
    %v88 = vld [vmem:[%s0 + $0x150] sm:$0xff]
    %v89 = vld [vmem:[%s0 + $0x158] sm:$0xff]
    %v90 = vld [vmem:[%s0 + $0x160] sm:$0xff]
    %v91 = vld [vmem:[%s0 + $0x168] sm:$0xff]
    %v92 = vld [vmem:[%s0 + $0x170] sm:$0xff]
    %v93 = vld [vmem:[%s0 + $0x178] sm:$0xff]
    %v94 = vld [vmem:[%s0 + $0x180] sm:$0xff]
    %v95 = vld [vmem:[%s0 + $0x188] sm:$0xff]
    %v96 = vld [vmem:[%s0 + $0x190] sm:$0xff]
    %v97 = vld [vmem:[%s0 + $0x198] sm:$0xff]
    %v98 = vld [vmem:[%s0 + $0x1a0] sm:$0xff]
    %v99 = vld [vmem:[%s0 + $0x1a8] sm:$0xff]
    %v100 = vld [vmem:[%s0 + $0x1b0] sm:$0xff]
    %v101 = vld [vmem:[%s0 + $0x1b8] sm:$0xff]
    %v102 = vld [vmem:[%s0 + $0x1c0] sm:$0xff]
    %v103 = vld [vmem:[%s0 + $0x1c8] sm:$0xff]
    %v104 = vld [vmem:[%s0 + $0x1d0] sm:$0xff]
    %v105 = vld [vmem:[%s0 + $0x1d8] sm:$0xff]
    %v106 = vld [vmem:[%s0 + $0x1e0] sm:$0xff]
    %v107 = vld [vmem:[%s0 + $0x1e8] sm:$0xff]
    %v108 = vld [vmem:[%s0 + $0x1f0] sm:$0xff]
    %v109 = vld [vmem:[%s0 + $0x1f8] sm:$0xff]
    %v110 = vld [vmem:[%s1] sm:$0xff]
    %v111 = vld [vmem:[%s1 + $0x8] sm:$0xff]
    %v112 = vld [vmem:[%s1 + $0x10] sm:$0xff]
    %v113 = vld [vmem:[%s1 + $0x18] sm:$0xff]
    %v114 = vld [vmem:[%s1 + $0x20] sm:$0xff]
    %v115 = vld [vmem:[%s1 + $0x28] sm:$0xff]
    %v116 = vld [vmem:[%s1 + $0x30] sm:$0xff]
    %v117 = vld [vmem:[%s1 + $0x38] sm:$0xff]
    %v118 = vld [vmem:[%s1 + $0x40] sm:$0xff]
    %v119 = vld [vmem:[%s1 + $0x48] sm:$0xff]
    %v120 = vld [vmem:[%s1 + $0x50] sm:$0xff]
    %v121 = vld [vmem:[%s1 + $0x58] sm:$0xff]
    %v122 = vld [vmem:[%s1 + $0x60] sm:$0xff]
    %v123 = vld [vmem:[%s1 + $0x68] sm:$0xff]
    %v124 = vld [vmem:[%s1 + $0x70] sm:$0xff]
    %v125 = vld [vmem:[%s1 + $0x78] sm:$0xff]
    %v126 = vld [vmem:[%s1 + $0x80] sm:$0xff]
    %v127 = vld [vmem:[%s1 + $0x88] sm:$0xff]
    %v128 = vld [vmem:[%s1 + $0x90] sm:$0xff]
    %v129 = vld [vmem:[%s1 + $0x98] sm:$0xff]
    %v130 = vld [vmem:[%s1 + $0xa0] sm:$0xff]
    %v131 = vld [vmem:[%s1 + $0xa8] sm:$0xff]
    %v132 = vld [vmem:[%s1 + $0xb0] sm:$0xff]
    %v133 = vld [vmem:[%s1 + $0xb8] sm:$0xff]
    %v134 = vld [vmem:[%s1 + $0xc0] sm:$0xff]
    %v135 = vld [vmem:[%s1 + $0xc8] sm:$0xff]
    %v136 = vld [vmem:[%s1 + $0xd0] sm:$0xff]
    %v137 = vld [vmem:[%s1 + $0xd8] sm:$0xff]
    %v138 = vld [vmem:[%s1 + $0xe0] sm:$0xff]
    %v139 = vld [vmem:[%s1 + $0xe8] sm:$0xff]
    %v140 = vld [vmem:[%s1 + $0xf0] sm:$0xff]
    %v141 = vld [vmem:[%s1 + $0xf8] sm:$0xff]
    %v142 = vld [vmem:[%s1 + $0x100] sm:$0xff]
    %v143 = vld [vmem:[%s1 + $0x108] sm:$0xff]
    %v144 = vld [vmem:[%s1 + $0x110] sm:$0xff]
    %v145 = vld [vmem:[%s1 + $0x118] sm:$0xff]
    %v146 = vld [vmem:[%s1 + $0x120] sm:$0xff]
    %v147 = vld [vmem:[%s1 + $0x128] sm:$0xff]
    %v148 = vld [vmem:[%s1 + $0x130] sm:$0xff]
    %v149 = vld [vmem:[%s1 + $0x138] sm:$0xff]
    %v150 = vld [vmem:[%s1 + $0x140] sm:$0xff]
    %v151 = vld [vmem:[%s1 + $0x148] sm:$0xff]
    %v152 = vld [vmem:[%s1 + $0x150] sm:$0xff]
    %v153 = vld [vmem:[%s1 + $0x158] sm:$0xff]
    %v154 = vld [vmem:[%s1 + $0x160] sm:$0xff]
    %v155 = vld [vmem:[%s1 + $0x168] sm:$0xff]
    %v156 = vld [vmem:[%s1 + $0x170] sm:$0xff]
    %v157 = vld [vmem:[%s1 + $0x178] sm:$0xff]
    %v158 = vld [vmem:[%s1 + $0x180] sm:$0xff]
    %v159 = vld [vmem:[%s1 + $0x188] sm:$0xff]
    %v160 = vld [vmem:[%s1 + $0x190] sm:$0xff]
    %v161 = vld [vmem:[%s1 + $0x198] sm:$0xff]
    %v162 = vld [vmem:[%s1 + $0x1a0] sm:$0xff]
    %v163 = vld [vmem:[%s1 + $0x1a8] sm:$0xff]
    %v164 = vld [vmem:[%s1 + $0x1b0] sm:$0xff]
    %v165 = vld [vmem:[%s1 + $0x1b8] sm:$0xff]
    %v166 = vld [vmem:[%s1 + $0x1c0] sm:$0xff]
    %v167 = vld [vmem:[%s1 + $0x1c8] sm:$0xff]
    %v168 = vld [vmem:[%s1 + $0x1d0] sm:$0xff]
    %v169 = vld [vmem:[%s1 + $0x1d8] sm:$0xff]
    %v170 = vld [vmem:[%s1 + $0x1e0] sm:$0xff]
    %v171 = vld [vmem:[%s1 + $0x1e8] sm:$0xff]
    %v172 = vld [vmem:[%s1 + $0x1f0] sm:$0xff]
    %v173 = vld [vmem:[%s1 + $0x1f8] sm:$0xff]
    %v174 = vmul.f32 %v46, %v110
    %v175 = vmul.f32 %v47, %v111
    %v176 = vmul.f32 %v48, %v112
    %v177 = vmul.f32 %v49, %v113
    %v178 = vmul.f32 %v50, %v114
    %v179 = vmul.f32 %v51, %v115
    %v180 = vmul.f32 %v52, %v116
    %v181 = vmul.f32 %v53, %v117
    %v182 = vmul.f32 %v54, %v118
    %v183 = vmul.f32 %v55, %v119
    %v184 = vmul.f32 %v56, %v120
    %v185 = vmul.f32 %v57, %v121
    %v186 = vmul.f32 %v58, %v122
    %v187 = vmul.f32 %v59, %v123
    %v188 = vmul.f32 %v60, %v124
    %v189 = vmul.f32 %v61, %v125
    %v190 = vmul.f32 %v62, %v126
    %v191 = vmul.f32 %v63, %v127
    %v192 = vmul.f32 %v64, %v128
    %v193 = vmul.f32 %v65, %v129
    %v194 = vmul.f32 %v66, %v130
    %v195 = vmul.f32 %v67, %v131
    %v196 = vmul.f32 %v68, %v132
    %v197 = vmul.f32 %v69, %v133
    %v198 = vmul.f32 %v70, %v134
    %v199 = vmul.f32 %v71, %v135
    %v200 = vmul.f32 %v72, %v136
    %v201 = vmul.f32 %v73, %v137
    %v202 = vmul.f32 %v74, %v138
    %v203 = vmul.f32 %v75, %v139
    %v204 = vmul.f32 %v76, %v140
    %v205 = vmul.f32 %v77, %v141
    %v206 = vmul.f32 %v78, %v142
    %v207 = vmul.f32 %v79, %v143
    %v208 = vmul.f32 %v80, %v144
    %v209 = vmul.f32 %v81, %v145
    %v210 = vmul.f32 %v82, %v146
    %v211 = vmul.f32 %v83, %v147
    %v212 = vmul.f32 %v84, %v148
    %v213 = vmul.f32 %v85, %v149
    %v214 = vmul.f32 %v86, %v150
    %v215 = vmul.f32 %v87, %v151
    %v216 = vmul.f32 %v88, %v152
    %v217 = vmul.f32 %v89, %v153
    %v218 = vmul.f32 %v90, %v154
    %v219 = vmul.f32 %v91, %v155
    %v220 = vmul.f32 %v92, %v156
    %v221 = vmul.f32 %v93, %v157
    %v222 = vmul.f32 %v94, %v158
    %v223 = vmul.f32 %v95, %v159
    %v224 = vmul.f32 %v96, %v160
    %v225 = vmul.f32 %v97, %v161
    %v226 = vmul.f32 %v98, %v162
    %v227 = vmul.f32 %v99, %v163
    %v228 = vmul.f32 %v100, %v164
    %v229 = vmul.f32 %v101, %v165
    %v230 = vmul.f32 %v102, %v166
    %v231 = vmul.f32 %v103, %v167
    %v232 = vmul.f32 %v104, %v168
    %v233 = vmul.f32 %v105, %v169
    %v234 = vmul.f32 %v106, %v170
    %v235 = vmul.f32 %v107, %v171
    %v236 = vmul.f32 %v108, %v172
    %v237 = vmul.f32 %v109, %v173
    %v238 = vld [vmem:[%s4] sm:$0xff]
    %v239 = vld [vmem:[%s4 + $0x8] sm:$0xff]
    %v240 = vld [vmem:[%s4 + $0x10] sm:$0xff]
    %v241 = vld [vmem:[%s4 + $0x18] sm:$0xff]
    %v242 = vld [vmem:[%s5] sm:$0x1]
    %v244 = vlaneseq
    %v245 = vshrl.u32 %v244, 7
    %v246 = vsub.s32 0, %v245
    %v247 = vrot.slane %v242, %v246
    %vm249 = vcmask 261120
    %v251 = vsel %vm249, %v174, 0
    %v254 = vsel %vm249, %v175, 0
    %v257 = vsel %vm249, %v176, 0
    %v260 = vsel %vm249, %v177, 0
    %v263 = vsel %vm249, %v178, 0
    %v266 = vsel %vm249, %v179, 0
    %v269 = vsel %vm249, %v180, 0
    %v272 = vsel %vm249, %v181, 0
    %v275 = vsel %vm249, %v182, 0
    %v278 = vsel %vm249, %v183, 0
    %v281 = vsel %vm249, %v184, 0
    %v284 = vsel %vm249, %v185, 0
    %v287 = vsel %vm249, %v186, 0
    %v290 = vsel %vm249, %v187, 0
    %v293 = vsel %vm249, %v188, 0
    %v296 = vsel %vm249, %v189, 0
    %v299 = vsel %vm249, %v190, 0
    %v302 = vsel %vm249, %v191, 0
    %v305 = vsel %vm249, %v192, 0
    %v308 = vsel %vm249, %v193, 0
    %v311 = vsel %vm249, %v194, 0
    %v314 = vsel %vm249, %v195, 0
    %v317 = vsel %vm249, %v196, 0
    %v320 = vsel %vm249, %v197, 0
    %v323 = vsel %vm249, %v198, 0
    %v326 = vsel %vm249, %v199, 0
    %v329 = vsel %vm249, %v200, 0
    %v332 = vsel %vm249, %v201, 0
    %v335 = vsel %vm249, %v202, 0
    %v338 = vsel %vm249, %v203, 0
    %v341 = vsel %vm249, %v204, 0
    %v344 = vsel %vm249, %v205, 0
    %v347 = vsel %vm249, %v206, 0
    %v350 = vsel %vm249, %v207, 0
    %v353 = vsel %vm249, %v208, 0
    %v356 = vsel %vm249, %v209, 0
    %v359 = vsel %vm249, %v210, 0
    %v362 = vsel %vm249, %v211, 0
    %v365 = vsel %vm249, %v212, 0
    %v368 = vsel %vm249, %v213, 0
    %v371 = vsel %vm249, %v214, 0
    %v374 = vsel %vm249, %v215, 0
    %v377 = vsel %vm249, %v216, 0
    %v380 = vsel %vm249, %v217, 0
    %v383 = vsel %vm249, %v218, 0
    %v386 = vsel %vm249, %v219, 0
    %v389 = vsel %vm249, %v220, 0
    %v392 = vsel %vm249, %v221, 0
    %v395 = vsel %vm249, %v222, 0
    %v398 = vsel %vm249, %v223, 0
    %v401 = vsel %vm249, %v224, 0
    %v404 = vsel %vm249, %v225, 0
    %v407 = vsel %vm249, %v226, 0
    %v410 = vsel %vm249, %v227, 0
    %v413 = vsel %vm249, %v228, 0
    %v416 = vsel %vm249, %v229, 0
    %v419 = vsel %vm249, %v230, 0
    %v422 = vsel %vm249, %v231, 0
    %v425 = vsel %vm249, %v232, 0
    %v428 = vsel %vm249, %v233, 0
    %v431 = vsel %vm249, %v234, 0
    %v434 = vsel %vm249, %v235, 0
    %v437 = vsel %vm249, %v236, 0
    %v440 = vsel %vm249, %v237, 0
    %442 = vmatprep.subr.mxu0 0.0
    %443 = vmatpush1.msra.mxu0 %v238
    %444 = vmatprep.subr.mxu0 0.0
    %445 = vmatpush1.msra.mxu0 %v239
    %446 = vmatprep.subr.mxu0 0.0
    %447 = vmatpush1.msra.mxu0 %v240
    %448 = vmatprep.subr.mxu0 0.0
    %449 = vmatpush1.msra.mxu0 %v241
    %450 = vmatprep.subr.mxu0 0.0
    %451 = vmatpush1.msra.mxu0 0.0
    %452 = vmatprep.subr.mxu0 0.0
    %453 = vmatpush1.msra.mxu0 0.0
    %454 = vmatprep.subr.mxu0 0.0
    %455 = vmatpush1.msra.mxu0 0.0
    %456 = vmatprep.subr.mxu0 0.0
    %457 = vmatpush1.msra.mxu0 0.0
    %458 = vmatprep.subr.mxu0 0.0
    %459 = vmatpush1.msra.mxu0 0.0
    %460 = vmatprep.subr.mxu0 0.0
    %461 = vmatpush1.msra.mxu0 0.0
    %462 = vmatprep.subr.mxu0 0.0
    %463 = vmatpush1.msra.mxu0 0.0
    %464 = vmatprep.subr.mxu0 0.0
    %465 = vmatpush1.msra.mxu0 0.0
    %466 = vmatprep.subr.mxu0 0.0
    %467 = vmatpush1.msra.mxu0 0.0
    %468 = vmatprep.subr.mxu0 0.0
    %469 = vmatpush1.msra.mxu0 0.0
    %470 = vmatprep.subr.mxu0 0.0
    %471 = vmatpush1.msra.mxu0 0.0
    %472 = vmatprep.subr.mxu0 0.0
    %473 = vmatpush1.msra.mxu0 0.0
    %474 = vmatprep.subr.mxu0 0.0
    %475 = vmatpush1.msra.mxu0 0.0
    %476 = vmatprep.subr.mxu0 0.0
    %477 = vmatpush1.msra.mxu0 0.0
    %478 = vmatprep.subr.mxu0 0.0
    %479 = vmatpush1.msra.mxu0 0.0
    %480 = vmatprep.subr.mxu0 0.0
    %481 = vmatpush1.msra.mxu0 0.0
    %482 = vmatprep.subr.mxu0 0.0
    %483 = vmatpush1.msra.mxu0 0.0
    %484 = vmatprep.subr.mxu0 0.0
    %485 = vmatpush1.msra.mxu0 0.0
    %486 = vmatprep.subr.mxu0 0.0
    %487 = vmatpush1.msra.mxu0 0.0
    %488 = vmatprep.subr.mxu0 0.0
    %489 = vmatpush1.msra.mxu0 0.0
    %490 = vmatprep.subr.mxu0 0.0
    %491 = vmatpush1.msra.mxu0 0.0
    %492 = vmatprep.subr.mxu0 0.0
    %493 = vmatpush1.msra.mxu0 0.0
    %494 = vmatprep.subr.mxu0 0.0
    %495 = vmatpush1.msra.mxu0 0.0
    %496 = vmatprep.subr.mxu0 0.0
    %497 = vmatpush1.msra.mxu0 0.0
    %498 = vmatprep.subr.mxu0 0.0
    %499 = vmatpush1.msra.mxu0 0.0
    %500 = vmatprep.subr.mxu0 0.0
    %501 = vmatpush1.msra.mxu0 0.0
    %502 = vmatprep.subr.mxu0 0.0
    %503 = vmatpush1.msra.mxu0 0.0
    %504 = vmatprep.subr.mxu0 0.0
    %505 = vmatpush1.msra.mxu0 0.0
    %506 = vmatprep.mubr.f32.mxu0 0.0
    %507 = vmatmul.mubr.f32.gmra.mrb[0].mxu0 %v251
    %v508 = vpop.f32.mrb[0].mxu0
    %v509 = vadd.f32 %v247, %v508
    %v510 = vpop.f32.mrb[0].mxu0
    %511 = vmatprep.mubr.f32.mxu0 0.0
    %512 = vmatmul.mubr.f32.gmra.mrb[0].mxu0 %v254
    %v513 = vpop.f32.mrb[0].mxu0
    %v514 = vadd.f32 %v247, %v513
    %v515 = vpop.f32.mrb[0].mxu0
    %516 = vmatprep.mubr.f32.mxu0 0.0
    %517 = vmatmul.mubr.f32.gmra.mrb[0].mxu0 %v257
    %v518 = vpop.f32.mrb[0].mxu0
    %v519 = vadd.f32 %v247, %v518
    %v520 = vpop.f32.mrb[0].mxu0
    %521 = vmatprep.mubr.f32.mxu0 0.0
    %522 = vmatmul.mubr.f32.gmra.mrb[0].mxu0 %v260
    %v523 = vpop.f32.mrb[0].mxu0
    %v524 = vadd.f32 %v247, %v523
    %v525 = vpop.f32.mrb[0].mxu0
    %526 = vmatprep.mubr.f32.mxu0 0.0
    %527 = vmatmul.mubr.f32.gmra.mrb[0].mxu0 %v263
    %v528 = vpop.f32.mrb[0].mxu0
    %v529 = vadd.f32 %v247, %v528
    %v530 = vpop.f32.mrb[0].mxu0
    %531 = vmatprep.mubr.f32.mxu0 0.0
    %532 = vmatmul.mubr.f32.gmra.mrb[0].mxu0 %v266
    %v533 = vpop.f32.mrb[0].mxu0
    %v534 = vadd.f32 %v247, %v533
    %v535 = vpop.f32.mrb[0].mxu0
    %536 = vmatprep.mubr.f32.mxu0 0.0
    %537 = vmatmul.mubr.f32.gmra.mrb[0].mxu0 %v269
    %v538 = vpop.f32.mrb[0].mxu0
    %v539 = vadd.f32 %v247, %v538
    %v540 = vpop.f32.mrb[0].mxu0
    %541 = vmatprep.mubr.f32.mxu0 0.0
    %542 = vmatmul.mubr.f32.gmra.mrb[0].mxu0 %v272
    %v543 = vpop.f32.mrb[0].mxu0
    %v544 = vadd.f32 %v247, %v543
    %v545 = vpop.f32.mrb[0].mxu0
    %546 = vmatprep.mubr.f32.mxu0 0.0
    %547 = vmatmul.mubr.f32.gmra.mrb[0].mxu0 %v275
    %v548 = vpop.f32.mrb[0].mxu0
    %v549 = vadd.f32 %v247, %v548
    %v550 = vpop.f32.mrb[0].mxu0
    %551 = vmatprep.mubr.f32.mxu0 0.0
    %552 = vmatmul.mubr.f32.gmra.mrb[0].mxu0 %v278
    %v553 = vpop.f32.mrb[0].mxu0
    %v554 = vadd.f32 %v247, %v553
    %v555 = vpop.f32.mrb[0].mxu0
    %556 = vmatprep.mubr.f32.mxu0 0.0
    %557 = vmatmul.mubr.f32.gmra.mrb[0].mxu0 %v281
    %v558 = vpop.f32.mrb[0].mxu0
    %v559 = vadd.f32 %v247, %v558
    %v560 = vpop.f32.mrb[0].mxu0
    %561 = vmatprep.mubr.f32.mxu0 0.0
    %562 = vmatmul.mubr.f32.gmra.mrb[0].mxu0 %v284
    %v563 = vpop.f32.mrb[0].mxu0
    %v564 = vadd.f32 %v247, %v563
    %v565 = vpop.f32.mrb[0].mxu0
    %566 = vmatprep.mubr.f32.mxu0 0.0
    %567 = vmatmul.mubr.f32.gmra.mrb[0].mxu0 %v287
    %v568 = vpop.f32.mrb[0].mxu0
    %v569 = vadd.f32 %v247, %v568
    %v570 = vpop.f32.mrb[0].mxu0
    %571 = vmatprep.mubr.f32.mxu0 0.0
    %572 = vmatmul.mubr.f32.gmra.mrb[0].mxu0 %v290
    %v573 = vpop.f32.mrb[0].mxu0
    %v574 = vadd.f32 %v247, %v573
    %v575 = vpop.f32.mrb[0].mxu0
    %576 = vmatprep.mubr.f32.mxu0 0.0
    %577 = vmatmul.mubr.f32.gmra.mrb[0].mxu0 %v293
    %v578 = vpop.f32.mrb[0].mxu0
    %v579 = vadd.f32 %v247, %v578
    %v580 = vpop.f32.mrb[0].mxu0
    %581 = vmatprep.mubr.f32.mxu0 0.0
    %582 = vmatmul.mubr.f32.gmra.mrb[0].mxu0 %v296
    %v583 = vpop.f32.mrb[0].mxu0
    %v584 = vadd.f32 %v247, %v583
    %v585 = vpop.f32.mrb[0].mxu0
    %586 = vmatprep.mubr.f32.mxu0 0.0
    %587 = vmatmul.mubr.f32.gmra.mrb[0].mxu0 %v299
    %v588 = vpop.f32.mrb[0].mxu0
    %v589 = vadd.f32 %v247, %v588
    %v590 = vpop.f32.mrb[0].mxu0
    %591 = vmatprep.mubr.f32.mxu0 0.0
    %592 = vmatmul.mubr.f32.gmra.mrb[0].mxu0 %v302
    %v593 = vpop.f32.mrb[0].mxu0
    %v594 = vadd.f32 %v247, %v593
    %v595 = vpop.f32.mrb[0].mxu0
    %596 = vmatprep.mubr.f32.mxu0 0.0
    %597 = vmatmul.mubr.f32.gmra.mrb[0].mxu0 %v305
    %v598 = vpop.f32.mrb[0].mxu0
    %v599 = vadd.f32 %v247, %v598
    %v600 = vpop.f32.mrb[0].mxu0
    %601 = vmatprep.mubr.f32.mxu0 0.0
    %602 = vmatmul.mubr.f32.gmra.mrb[0].mxu0 %v308
    %v603 = vpop.f32.mrb[0].mxu0
    %v604 = vadd.f32 %v247, %v603
    %v605 = vpop.f32.mrb[0].mxu0
    %606 = vmatprep.mubr.f32.mxu0 0.0
    %607 = vmatmul.mubr.f32.gmra.mrb[0].mxu0 %v311
    %v608 = vpop.f32.mrb[0].mxu0
    %v609 = vadd.f32 %v247, %v608
    %v610 = vpop.f32.mrb[0].mxu0
    %611 = vmatprep.mubr.f32.mxu0 0.0
    %612 = vmatmul.mubr.f32.gmra.mrb[0].mxu0 %v314
    %v613 = vpop.f32.mrb[0].mxu0
    %v614 = vadd.f32 %v247, %v613
    %v615 = vpop.f32.mrb[0].mxu0
    %616 = vmatprep.mubr.f32.mxu0 0.0
    %617 = vmatmul.mubr.f32.gmra.mrb[0].mxu0 %v317
    %v618 = vpop.f32.mrb[0].mxu0
    %v619 = vadd.f32 %v247, %v618
    %v620 = vpop.f32.mrb[0].mxu0
    %621 = vmatprep.mubr.f32.mxu0 0.0
    %622 = vmatmul.mubr.f32.gmra.mrb[0].mxu0 %v320
    %v623 = vpop.f32.mrb[0].mxu0
    %v624 = vadd.f32 %v247, %v623
    %v625 = vpop.f32.mrb[0].mxu0
    %626 = vmatprep.mubr.f32.mxu0 0.0
    %627 = vmatmul.mubr.f32.gmra.mrb[0].mxu0 %v323
    %v628 = vpop.f32.mrb[0].mxu0
    %v629 = vadd.f32 %v247, %v628
    %v630 = vpop.f32.mrb[0].mxu0
    %631 = vmatprep.mubr.f32.mxu0 0.0
    %632 = vmatmul.mubr.f32.gmra.mrb[0].mxu0 %v326
    %v633 = vpop.f32.mrb[0].mxu0
    %v634 = vadd.f32 %v247, %v633
    %v635 = vpop.f32.mrb[0].mxu0
    %636 = vmatprep.mubr.f32.mxu0 0.0
    %637 = vmatmul.mubr.f32.gmra.mrb[0].mxu0 %v329
    %v638 = vpop.f32.mrb[0].mxu0
    %v639 = vadd.f32 %v247, %v638
    %v640 = vpop.f32.mrb[0].mxu0
    %641 = vmatprep.mubr.f32.mxu0 0.0
    %642 = vmatmul.mubr.f32.gmra.mrb[0].mxu0 %v332
    %v643 = vpop.f32.mrb[0].mxu0
    %v644 = vadd.f32 %v247, %v643
    %v645 = vpop.f32.mrb[0].mxu0
    %646 = vmatprep.mubr.f32.mxu0 0.0
    %647 = vmatmul.mubr.f32.gmra.mrb[0].mxu0 %v335
    %v648 = vpop.f32.mrb[0].mxu0
    %v649 = vadd.f32 %v247, %v648
    %v650 = vpop.f32.mrb[0].mxu0
    %651 = vmatprep.mubr.f32.mxu0 0.0
    %652 = vmatmul.mubr.f32.gmra.mrb[0].mxu0 %v338
    %v653 = vpop.f32.mrb[0].mxu0
    %v654 = vadd.f32 %v247, %v653
    %v655 = vpop.f32.mrb[0].mxu0
    %656 = vmatprep.mubr.f32.mxu0 0.0
    %657 = vmatmul.mubr.f32.gmra.mrb[0].mxu0 %v341
    %v658 = vpop.f32.mrb[0].mxu0
    %v659 = vadd.f32 %v247, %v658
    %v660 = vpop.f32.mrb[0].mxu0
    %661 = vmatprep.mubr.f32.mxu0 0.0
    %662 = vmatmul.mubr.f32.gmra.mrb[0].mxu0 %v344
    %v663 = vpop.f32.mrb[0].mxu0
    %v664 = vadd.f32 %v247, %v663
    %v665 = vpop.f32.mrb[0].mxu0
    %666 = vmatprep.mubr.f32.mxu0 0.0
    %667 = vmatmul.mubr.f32.gmra.mrb[0].mxu0 %v347
    %v668 = vpop.f32.mrb[0].mxu0
    %v669 = vadd.f32 %v247, %v668
    %v670 = vpop.f32.mrb[0].mxu0
    %671 = vmatprep.mubr.f32.mxu0 0.0
    %672 = vmatmul.mubr.f32.gmra.mrb[0].mxu0 %v350
    %v673 = vpop.f32.mrb[0].mxu0
    %v674 = vadd.f32 %v247, %v673
    %v675 = vpop.f32.mrb[0].mxu0
    %676 = vmatprep.mubr.f32.mxu0 0.0
    %677 = vmatmul.mubr.f32.gmra.mrb[0].mxu0 %v353
    %v678 = vpop.f32.mrb[0].mxu0
    %v679 = vadd.f32 %v247, %v678
    %v680 = vpop.f32.mrb[0].mxu0
    %681 = vmatprep.mubr.f32.mxu0 0.0
    %682 = vmatmul.mubr.f32.gmra.mrb[0].mxu0 %v356
    %v683 = vpop.f32.mrb[0].mxu0
    %v684 = vadd.f32 %v247, %v683
    %v685 = vpop.f32.mrb[0].mxu0
    %686 = vmatprep.mubr.f32.mxu0 0.0
    %687 = vmatmul.mubr.f32.gmra.mrb[0].mxu0 %v359
    %v688 = vpop.f32.mrb[0].mxu0
    %v689 = vadd.f32 %v247, %v688
    %v690 = vpop.f32.mrb[0].mxu0
    %691 = vmatprep.mubr.f32.mxu0 0.0
    %692 = vmatmul.mubr.f32.gmra.mrb[0].mxu0 %v362
    %v693 = vpop.f32.mrb[0].mxu0
    %v694 = vadd.f32 %v247, %v693
    %v695 = vpop.f32.mrb[0].mxu0
    %696 = vmatprep.mubr.f32.mxu0 0.0
    %697 = vmatmul.mubr.f32.gmra.mrb[0].mxu0 %v365
    %v698 = vpop.f32.mrb[0].mxu0
    %v699 = vadd.f32 %v247, %v698
    %v700 = vpop.f32.mrb[0].mxu0
    %701 = vmatprep.mubr.f32.mxu0 0.0
    %702 = vmatmul.mubr.f32.gmra.mrb[0].mxu0 %v368
    %v703 = vpop.f32.mrb[0].mxu0
    %v704 = vadd.f32 %v247, %v703
    %v705 = vpop.f32.mrb[0].mxu0
    %706 = vmatprep.mubr.f32.mxu0 0.0
    %707 = vmatmul.mubr.f32.gmra.mrb[0].mxu0 %v371
    %v708 = vpop.f32.mrb[0].mxu0
    %v709 = vadd.f32 %v247, %v708
    %v710 = vpop.f32.mrb[0].mxu0
    %711 = vmatprep.mubr.f32.mxu0 0.0
    %712 = vmatmul.mubr.f32.gmra.mrb[0].mxu0 %v374
    %v713 = vpop.f32.mrb[0].mxu0
    %v714 = vadd.f32 %v247, %v713
    %v715 = vpop.f32.mrb[0].mxu0
    %716 = vmatprep.mubr.f32.mxu0 0.0
    %717 = vmatmul.mubr.f32.gmra.mrb[0].mxu0 %v377
    %v718 = vpop.f32.mrb[0].mxu0
    %v719 = vadd.f32 %v247, %v718
    %v720 = vpop.f32.mrb[0].mxu0
    %721 = vmatprep.mubr.f32.mxu0 0.0
    %722 = vmatmul.mubr.f32.gmra.mrb[0].mxu0 %v380
    %v723 = vpop.f32.mrb[0].mxu0
    %v724 = vadd.f32 %v247, %v723
    %v725 = vpop.f32.mrb[0].mxu0
    %726 = vmatprep.mubr.f32.mxu0 0.0
    %727 = vmatmul.mubr.f32.gmra.mrb[0].mxu0 %v383
    %v728 = vpop.f32.mrb[0].mxu0
    %v729 = vadd.f32 %v247, %v728
    %v730 = vpop.f32.mrb[0].mxu0
    %731 = vmatprep.mubr.f32.mxu0 0.0
    %732 = vmatmul.mubr.f32.gmra.mrb[0].mxu0 %v386
    %v733 = vpop.f32.mrb[0].mxu0
    %v734 = vadd.f32 %v247, %v733
    %v735 = vpop.f32.mrb[0].mxu0
    %736 = vmatprep.mubr.f32.mxu0 0.0
    %737 = vmatmul.mubr.f32.gmra.mrb[0].mxu0 %v389
    %v738 = vpop.f32.mrb[0].mxu0
    %v739 = vadd.f32 %v247, %v738
    %v740 = vpop.f32.mrb[0].mxu0
    %741 = vmatprep.mubr.f32.mxu0 0.0
    %742 = vmatmul.mubr.f32.gmra.mrb[0].mxu0 %v392
    %v743 = vpop.f32.mrb[0].mxu0
    %v744 = vadd.f32 %v247, %v743
    %v745 = vpop.f32.mrb[0].mxu0
    %746 = vmatprep.mubr.f32.mxu0 0.0
    %747 = vmatmul.mubr.f32.gmra.mrb[0].mxu0 %v395
    %v748 = vpop.f32.mrb[0].mxu0
    %v749 = vadd.f32 %v247, %v748
    %v750 = vpop.f32.mrb[0].mxu0
    %751 = vmatprep.mubr.f32.mxu0 0.0
    %752 = vmatmul.mubr.f32.gmra.mrb[0].mxu0 %v398
    %v753 = vpop.f32.mrb[0].mxu0
    %v754 = vadd.f32 %v247, %v753
    %v755 = vpop.f32.mrb[0].mxu0
    %756 = vmatprep.mubr.f32.mxu0 0.0
    %757 = vmatmul.mubr.f32.gmra.mrb[0].mxu0 %v401
    %v758 = vpop.f32.mrb[0].mxu0
    %v759 = vadd.f32 %v247, %v758
    %v760 = vpop.f32.mrb[0].mxu0
    %761 = vmatprep.mubr.f32.mxu0 0.0
    %762 = vmatmul.mubr.f32.gmra.mrb[0].mxu0 %v404
    %v763 = vpop.f32.mrb[0].mxu0
    %v764 = vadd.f32 %v247, %v763
    %v765 = vpop.f32.mrb[0].mxu0
    %766 = vmatprep.mubr.f32.mxu0 0.0
    %767 = vmatmul.mubr.f32.gmra.mrb[0].mxu0 %v407
    %v768 = vpop.f32.mrb[0].mxu0
    %v769 = vadd.f32 %v247, %v768
    %v770 = vpop.f32.mrb[0].mxu0
    %771 = vmatprep.mubr.f32.mxu0 0.0
    %772 = vmatmul.mubr.f32.gmra.mrb[0].mxu0 %v410
    %v773 = vpop.f32.mrb[0].mxu0
    %v774 = vadd.f32 %v247, %v773
    %v775 = vpop.f32.mrb[0].mxu0
    %776 = vmatprep.mubr.f32.mxu0 0.0
    %777 = vmatmul.mubr.f32.gmra.mrb[0].mxu0 %v413
    %v778 = vpop.f32.mrb[0].mxu0
    %v779 = vadd.f32 %v247, %v778
    %v780 = vpop.f32.mrb[0].mxu0
    %781 = vmatprep.mubr.f32.mxu0 0.0
    %782 = vmatmul.mubr.f32.gmra.mrb[0].mxu0 %v416
    %v783 = vpop.f32.mrb[0].mxu0
    %v784 = vadd.f32 %v247, %v783
    %v785 = vpop.f32.mrb[0].mxu0
    %786 = vmatprep.mubr.f32.mxu0 0.0
    %787 = vmatmul.mubr.f32.gmra.mrb[0].mxu0 %v419
    %v788 = vpop.f32.mrb[0].mxu0
    %v789 = vadd.f32 %v247, %v788
    %v790 = vpop.f32.mrb[0].mxu0
    %791 = vmatprep.mubr.f32.mxu0 0.0
    %792 = vmatmul.mubr.f32.gmra.mrb[0].mxu0 %v422
    %v793 = vpop.f32.mrb[0].mxu0
    %v794 = vadd.f32 %v247, %v793
    %v795 = vpop.f32.mrb[0].mxu0
    %796 = vmatprep.mubr.f32.mxu0 0.0
    %797 = vmatmul.mubr.f32.gmra.mrb[0].mxu0 %v425
    %v798 = vpop.f32.mrb[0].mxu0
    %v799 = vadd.f32 %v247, %v798
    %v800 = vpop.f32.mrb[0].mxu0
    %801 = vmatprep.mubr.f32.mxu0 0.0
    %802 = vmatmul.mubr.f32.gmra.mrb[0].mxu0 %v428
    %v803 = vpop.f32.mrb[0].mxu0
    %v804 = vadd.f32 %v247, %v803
    %v805 = vpop.f32.mrb[0].mxu0
    %806 = vmatprep.mubr.f32.mxu0 0.0
    %807 = vmatmul.mubr.f32.gmra.mrb[0].mxu0 %v431
    %v808 = vpop.f32.mrb[0].mxu0
    %v809 = vadd.f32 %v247, %v808
    %v810 = vpop.f32.mrb[0].mxu0
    %811 = vmatprep.mubr.f32.mxu0 0.0
    %812 = vmatmul.mubr.f32.gmra.mrb[0].mxu0 %v434
    %v813 = vpop.f32.mrb[0].mxu0
    %v814 = vadd.f32 %v247, %v813
    %v815 = vpop.f32.mrb[0].mxu0
    %816 = vmatprep.mubr.f32.mxu0 0.0
    %817 = vmatmul.mubr.f32.gmra.mrb[0].mxu0 %v437
    %v818 = vpop.f32.mrb[0].mxu0
    %v819 = vadd.f32 %v247, %v818
    %v820 = vpop.f32.mrb[0].mxu0
    %821 = vmatprep.mubr.f32.mxu0 0.0
    %822 = vmatmul.mubr.f32.gmra.mrb[0].mxu0 %v440
    %v823 = vpop.f32.mrb[0].mxu0
    %v824 = vadd.f32 %v247, %v823
    %v825 = vpop.f32.mrb[0].mxu0
    %826 = vdwg.mxu0
    %v827 = vmax.f32 %v509, 0.0
    %v828 = vmax.f32 %v514, 0.0
    %v829 = vmax.f32 %v519, 0.0
    %v830 = vmax.f32 %v524, 0.0
    %v831 = vmax.f32 %v529, 0.0
    %v832 = vmax.f32 %v534, 0.0
    %v833 = vmax.f32 %v539, 0.0
    %v834 = vmax.f32 %v544, 0.0
    %v835 = vmax.f32 %v549, 0.0
    %v836 = vmax.f32 %v554, 0.0
    %v837 = vmax.f32 %v559, 0.0
    %v838 = vmax.f32 %v564, 0.0
    %v839 = vmax.f32 %v569, 0.0
    %v840 = vmax.f32 %v574, 0.0
    %v841 = vmax.f32 %v579, 0.0
    %v842 = vmax.f32 %v584, 0.0
    %v843 = vmax.f32 %v589, 0.0
    %v844 = vmax.f32 %v594, 0.0
    %v845 = vmax.f32 %v599, 0.0
    %v846 = vmax.f32 %v604, 0.0
    %v847 = vmax.f32 %v609, 0.0
    %v848 = vmax.f32 %v614, 0.0
    %v849 = vmax.f32 %v619, 0.0
    %v850 = vmax.f32 %v624, 0.0
    %v851 = vmax.f32 %v629, 0.0
    %v852 = vmax.f32 %v634, 0.0
    %v853 = vmax.f32 %v639, 0.0
    %v854 = vmax.f32 %v644, 0.0
    %v855 = vmax.f32 %v649, 0.0
    %v856 = vmax.f32 %v654, 0.0
    %v857 = vmax.f32 %v659, 0.0
    %v858 = vmax.f32 %v664, 0.0
    %v859 = vmax.f32 %v669, 0.0
    %v860 = vmax.f32 %v674, 0.0
    %v861 = vmax.f32 %v679, 0.0
    %v862 = vmax.f32 %v684, 0.0
    %v863 = vmax.f32 %v689, 0.0
    %v864 = vmax.f32 %v694, 0.0
    %v865 = vmax.f32 %v699, 0.0
    %v866 = vmax.f32 %v704, 0.0
    %v867 = vmax.f32 %v709, 0.0
    %v868 = vmax.f32 %v714, 0.0
    %v869 = vmax.f32 %v719, 0.0
    %v870 = vmax.f32 %v724, 0.0
    %v871 = vmax.f32 %v729, 0.0
    %v872 = vmax.f32 %v734, 0.0
    %v873 = vmax.f32 %v739, 0.0
    %v874 = vmax.f32 %v744, 0.0
    %v875 = vmax.f32 %v749, 0.0
    %v876 = vmax.f32 %v754, 0.0
    %v877 = vmax.f32 %v759, 0.0
    %v878 = vmax.f32 %v764, 0.0
    %v879 = vmax.f32 %v769, 0.0
    %v880 = vmax.f32 %v774, 0.0
    %v881 = vmax.f32 %v779, 0.0
    %v882 = vmax.f32 %v784, 0.0
    %v883 = vmax.f32 %v789, 0.0
    %v884 = vmax.f32 %v794, 0.0
    %v885 = vmax.f32 %v799, 0.0
    %v886 = vmax.f32 %v804, 0.0
    %v887 = vmax.f32 %v809, 0.0
    %v888 = vmax.f32 %v814, 0.0
    %v889 = vmax.f32 %v819, 0.0
    %v890 = vmax.f32 %v824, 0.0
    %v891 = vld [vmem:[%s6] sm:$0xff]
    %v892 = vld [vmem:[%s6 + $0x8] sm:$0xff]
    %v893 = vld [vmem:[%s6 + $0x10] sm:$0xff]
    %v894 = vld [vmem:[%s6 + $0x18] sm:$0xff]
    %v895 = vld [vmem:[%s6 + $0x20] sm:$0xff]
    %v896 = vld [vmem:[%s6 + $0x28] sm:$0xff]
    %v897 = vld [vmem:[%s6 + $0x30] sm:$0xff]
    %v898 = vld [vmem:[%s6 + $0x38] sm:$0xff]
    %v899 = vld [vmem:[%s7] sm:$0x1]
    %v901 = vlaneseq
    %v902 = vshrl.u32 %v901, 7
    %v903 = vsub.s32 0, %v902
    %v904 = vrot.slane %v899, %v903
    %vm906 = vcmask 523264
    %v908 = vsel %vm906, %v827, 0
    %v911 = vsel %vm906, %v828, 0
    %v914 = vsel %vm906, %v829, 0
    %v917 = vsel %vm906, %v830, 0
    %v920 = vsel %vm906, %v831, 0
    %v923 = vsel %vm906, %v832, 0
    %v926 = vsel %vm906, %v833, 0
    %v929 = vsel %vm906, %v834, 0
    %v932 = vsel %vm906, %v835, 0
    %v935 = vsel %vm906, %v836, 0
    %v938 = vsel %vm906, %v837, 0
    %v941 = vsel %vm906, %v838, 0
    %v944 = vsel %vm906, %v839, 0
    %v947 = vsel %vm906, %v840, 0
    %v950 = vsel %vm906, %v841, 0
    %v953 = vsel %vm906, %v842, 0
    %v956 = vsel %vm906, %v843, 0
    %v959 = vsel %vm906, %v844, 0
    %v962 = vsel %vm906, %v845, 0
    %v965 = vsel %vm906, %v846, 0
    %v968 = vsel %vm906, %v847, 0
    %v971 = vsel %vm906, %v848, 0
    %v974 = vsel %vm906, %v849, 0
    %v977 = vsel %vm906, %v850, 0
    %v980 = vsel %vm906, %v851, 0
    %v983 = vsel %vm906, %v852, 0
    %v986 = vsel %vm906, %v853, 0
    %v989 = vsel %vm906, %v854, 0
    %v992 = vsel %vm906, %v855, 0
    %v995 = vsel %vm906, %v856, 0
    %v998 = vsel %vm906, %v857, 0
    %v1001 = vsel %vm906, %v858, 0
    %v1004 = vsel %vm906, %v859, 0
    %v1007 = vsel %vm906, %v860, 0
    %v1010 = vsel %vm906, %v861, 0
    %v1013 = vsel %vm906, %v862, 0
    %v1016 = vsel %vm906, %v863, 0
    %v1019 = vsel %vm906, %v864, 0
    %v1022 = vsel %vm906, %v865, 0
    %v1025 = vsel %vm906, %v866, 0
    %v1028 = vsel %vm906, %v867, 0
    %v1031 = vsel %vm906, %v868, 0
    %v1034 = vsel %vm906, %v869, 0
    %v1037 = vsel %vm906, %v870, 0
    %v1040 = vsel %vm906, %v871, 0
    %v1043 = vsel %vm906, %v872, 0
    %v1046 = vsel %vm906, %v873, 0
    %v1049 = vsel %vm906, %v874, 0
    %v1052 = vsel %vm906, %v875, 0
    %v1055 = vsel %vm906, %v876, 0
    %v1058 = vsel %vm906, %v877, 0
    %v1061 = vsel %vm906, %v878, 0
    %v1064 = vsel %vm906, %v879, 0
    %v1067 = vsel %vm906, %v880, 0
    %v1070 = vsel %vm906, %v881, 0
    %v1073 = vsel %vm906, %v882, 0
    %v1076 = vsel %vm906, %v883, 0
    %v1079 = vsel %vm906, %v884, 0
    %v1082 = vsel %vm906, %v885, 0
    %v1085 = vsel %vm906, %v886, 0
    %v1088 = vsel %vm906, %v887, 0
    %v1091 = vsel %vm906, %v888, 0
    %v1094 = vsel %vm906, %v889, 0
    %v1097 = vsel %vm906, %v890, 0
    %1099 = vmatprep.subr.mxu0 0.0
    %1100 = vmatpush1.msra.mxu0 %v891
    %1101 = vmatprep.subr.mxu0 0.0
    %1102 = vmatpush1.msra.mxu0 %v892
    %1103 = vmatprep.subr.mxu0 0.0
    %1104 = vmatpush1.msra.mxu0 %v893
    %1105 = vmatprep.subr.mxu0 0.0
    %1106 = vmatpush1.msra.mxu0 %v894
    %1107 = vmatprep.subr.mxu0 0.0
    %1108 = vmatpush1.msra.mxu0 %v895
    %1109 = vmatprep.subr.mxu0 0.0
    %1110 = vmatpush1.msra.mxu0 %v896
    %1111 = vmatprep.subr.mxu0 0.0
    %1112 = vmatpush1.msra.mxu0 %v897
    %1113 = vmatprep.subr.mxu0 0.0
    %1114 = vmatpush1.msra.mxu0 %v898
    %1115 = vmatprep.subr.mxu0 0.0
    %1116 = vmatpush1.msra.mxu0 0.0
    %1117 = vmatprep.subr.mxu0 0.0
    %1118 = vmatpush1.msra.mxu0 0.0
    %1119 = vmatprep.subr.mxu0 0.0
    %1120 = vmatpush1.msra.mxu0 0.0
    %1121 = vmatprep.subr.mxu0 0.0
    %1122 = vmatpush1.msra.mxu0 0.0
    %1123 = vmatprep.subr.mxu0 0.0
    %1124 = vmatpush1.msra.mxu0 0.0
    %1125 = vmatprep.subr.mxu0 0.0
    %1126 = vmatpush1.msra.mxu0 0.0
    %1127 = vmatprep.subr.mxu0 0.0
    %1128 = vmatpush1.msra.mxu0 0.0
    %1129 = vmatprep.subr.mxu0 0.0
    %1130 = vmatpush1.msra.mxu0 0.0
    %1131 = vmatprep.subr.mxu0 0.0
    %1132 = vmatpush1.msra.mxu0 0.0
    %1133 = vmatprep.subr.mxu0 0.0
    %1134 = vmatpush1.msra.mxu0 0.0
    %1135 = vmatprep.subr.mxu0 0.0
    %1136 = vmatpush1.msra.mxu0 0.0
    %1137 = vmatprep.subr.mxu0 0.0
    %1138 = vmatpush1.msra.mxu0 0.0
    %1139 = vmatprep.subr.mxu0 0.0
    %1140 = vmatpush1.msra.mxu0 0.0
    %1141 = vmatprep.subr.mxu0 0.0
    %1142 = vmatpush1.msra.mxu0 0.0
    %1143 = vmatprep.subr.mxu0 0.0
    %1144 = vmatpush1.msra.mxu0 0.0
    %1145 = vmatprep.subr.mxu0 0.0
    %1146 = vmatpush1.msra.mxu0 0.0
    %1147 = vmatprep.subr.mxu0 0.0
    %1148 = vmatpush1.msra.mxu0 0.0
    %1149 = vmatprep.subr.mxu0 0.0
    %1150 = vmatpush1.msra.mxu0 0.0
    %1151 = vmatprep.subr.mxu0 0.0
    %1152 = vmatpush1.msra.mxu0 0.0
    %1153 = vmatprep.subr.mxu0 0.0
    %1154 = vmatpush1.msra.mxu0 0.0
    %1155 = vmatprep.subr.mxu0 0.0
    %1156 = vmatpush1.msra.mxu0 0.0
    %1157 = vmatprep.subr.mxu0 0.0
    %1158 = vmatpush1.msra.mxu0 0.0
    %1159 = vmatprep.subr.mxu0 0.0
    %1160 = vmatpush1.msra.mxu0 0.0
    %1161 = vmatprep.subr.mxu0 0.0
    %1162 = vmatpush1.msra.mxu0 0.0
    %1163 = vmatprep.mubr.f32.mxu0 0.0
    %1164 = vmatmul.mubr.f32.gmra.mrb[0].mxu0 %v908
    %v1165 = vpop.f32.mrb[0].mxu0
    %v1166 = vadd.f32 %v904, %v1165
    %v1167 = vpop.f32.mrb[0].mxu0
    %1168 = vmatprep.mubr.f32.mxu0 0.0
    %1169 = vmatmul.mubr.f32.gmra.mrb[0].mxu0 %v911
    %v1170 = vpop.f32.mrb[0].mxu0
    %v1171 = vadd.f32 %v904, %v1170
    %v1172 = vpop.f32.mrb[0].mxu0
    %1173 = vmatprep.mubr.f32.mxu0 0.0
    %1174 = vmatmul.mubr.f32.gmra.mrb[0].mxu0 %v914
    %v1175 = vpop.f32.mrb[0].mxu0
    %v1176 = vadd.f32 %v904, %v1175
    %v1177 = vpop.f32.mrb[0].mxu0
    %1178 = vmatprep.mubr.f32.mxu0 0.0
    %1179 = vmatmul.mubr.f32.gmra.mrb[0].mxu0 %v917
    %v1180 = vpop.f32.mrb[0].mxu0
    %v1181 = vadd.f32 %v904, %v1180
    %v1182 = vpop.f32.mrb[0].mxu0
    %1183 = vmatprep.mubr.f32.mxu0 0.0
    %1184 = vmatmul.mubr.f32.gmra.mrb[0].mxu0 %v920
    %v1185 = vpop.f32.mrb[0].mxu0
    %v1186 = vadd.f32 %v904, %v1185
    %v1187 = vpop.f32.mrb[0].mxu0
    %1188 = vmatprep.mubr.f32.mxu0 0.0
    %1189 = vmatmul.mubr.f32.gmra.mrb[0].mxu0 %v923
    %v1190 = vpop.f32.mrb[0].mxu0
    %v1191 = vadd.f32 %v904, %v1190
    %v1192 = vpop.f32.mrb[0].mxu0
    %1193 = vmatprep.mubr.f32.mxu0 0.0
    %1194 = vmatmul.mubr.f32.gmra.mrb[0].mxu0 %v926
    %v1195 = vpop.f32.mrb[0].mxu0
    %v1196 = vadd.f32 %v904, %v1195
    %v1197 = vpop.f32.mrb[0].mxu0
    %1198 = vmatprep.mubr.f32.mxu0 0.0
    %1199 = vmatmul.mubr.f32.gmra.mrb[0].mxu0 %v929
    %v1200 = vpop.f32.mrb[0].mxu0
    %v1201 = vadd.f32 %v904, %v1200
    %v1202 = vpop.f32.mrb[0].mxu0
    %1203 = vmatprep.mubr.f32.mxu0 0.0
    %1204 = vmatmul.mubr.f32.gmra.mrb[0].mxu0 %v932
    %v1205 = vpop.f32.mrb[0].mxu0
    %v1206 = vadd.f32 %v904, %v1205
    %v1207 = vpop.f32.mrb[0].mxu0
    %1208 = vmatprep.mubr.f32.mxu0 0.0
    %1209 = vmatmul.mubr.f32.gmra.mrb[0].mxu0 %v935
    %v1210 = vpop.f32.mrb[0].mxu0
    %v1211 = vadd.f32 %v904, %v1210
    %v1212 = vpop.f32.mrb[0].mxu0
    %1213 = vmatprep.mubr.f32.mxu0 0.0
    %1214 = vmatmul.mubr.f32.gmra.mrb[0].mxu0 %v938
    %v1215 = vpop.f32.mrb[0].mxu0
    %v1216 = vadd.f32 %v904, %v1215
    %v1217 = vpop.f32.mrb[0].mxu0
    %1218 = vmatprep.mubr.f32.mxu0 0.0
    %1219 = vmatmul.mubr.f32.gmra.mrb[0].mxu0 %v941
    %v1220 = vpop.f32.mrb[0].mxu0
    %v1221 = vadd.f32 %v904, %v1220
    %v1222 = vpop.f32.mrb[0].mxu0
    %1223 = vmatprep.mubr.f32.mxu0 0.0
    %1224 = vmatmul.mubr.f32.gmra.mrb[0].mxu0 %v944
    %v1225 = vpop.f32.mrb[0].mxu0
    %v1226 = vadd.f32 %v904, %v1225
    %v1227 = vpop.f32.mrb[0].mxu0
    %1228 = vmatprep.mubr.f32.mxu0 0.0
    %1229 = vmatmul.mubr.f32.gmra.mrb[0].mxu0 %v947
    %v1230 = vpop.f32.mrb[0].mxu0
    %v1231 = vadd.f32 %v904, %v1230
    %v1232 = vpop.f32.mrb[0].mxu0
    %1233 = vmatprep.mubr.f32.mxu0 0.0
    %1234 = vmatmul.mubr.f32.gmra.mrb[0].mxu0 %v950
    %v1235 = vpop.f32.mrb[0].mxu0
    %v1236 = vadd.f32 %v904, %v1235
    %v1237 = vpop.f32.mrb[0].mxu0
    %1238 = vmatprep.mubr.f32.mxu0 0.0
    %1239 = vmatmul.mubr.f32.gmra.mrb[0].mxu0 %v953
    %v1240 = vpop.f32.mrb[0].mxu0
    %v1241 = vadd.f32 %v904, %v1240
    %v1242 = vpop.f32.mrb[0].mxu0
    %1243 = vmatprep.mubr.f32.mxu0 0.0
    %1244 = vmatmul.mubr.f32.gmra.mrb[0].mxu0 %v956
    %v1245 = vpop.f32.mrb[0].mxu0
    %v1246 = vadd.f32 %v904, %v1245
    %v1247 = vpop.f32.mrb[0].mxu0
    %1248 = vmatprep.mubr.f32.mxu0 0.0
    %1249 = vmatmul.mubr.f32.gmra.mrb[0].mxu0 %v959
    %v1250 = vpop.f32.mrb[0].mxu0
    %v1251 = vadd.f32 %v904, %v1250
    %v1252 = vpop.f32.mrb[0].mxu0
    %1253 = vmatprep.mubr.f32.mxu0 0.0
    %1254 = vmatmul.mubr.f32.gmra.mrb[0].mxu0 %v962
    %v1255 = vpop.f32.mrb[0].mxu0
    %v1256 = vadd.f32 %v904, %v1255
    %v1257 = vpop.f32.mrb[0].mxu0
    %1258 = vmatprep.mubr.f32.mxu0 0.0
    %1259 = vmatmul.mubr.f32.gmra.mrb[0].mxu0 %v965
    %v1260 = vpop.f32.mrb[0].mxu0
    %v1261 = vadd.f32 %v904, %v1260
    %v1262 = vpop.f32.mrb[0].mxu0
    %1263 = vmatprep.mubr.f32.mxu0 0.0
    %1264 = vmatmul.mubr.f32.gmra.mrb[0].mxu0 %v968
    %v1265 = vpop.f32.mrb[0].mxu0
    %v1266 = vadd.f32 %v904, %v1265
    %v1267 = vpop.f32.mrb[0].mxu0
    %1268 = vmatprep.mubr.f32.mxu0 0.0
    %1269 = vmatmul.mubr.f32.gmra.mrb[0].mxu0 %v971
    %v1270 = vpop.f32.mrb[0].mxu0
    %v1271 = vadd.f32 %v904, %v1270
    %v1272 = vpop.f32.mrb[0].mxu0
    %1273 = vmatprep.mubr.f32.mxu0 0.0
    %1274 = vmatmul.mubr.f32.gmra.mrb[0].mxu0 %v974
    %v1275 = vpop.f32.mrb[0].mxu0
    %v1276 = vadd.f32 %v904, %v1275
    %v1277 = vpop.f32.mrb[0].mxu0
    %1278 = vmatprep.mubr.f32.mxu0 0.0
    %1279 = vmatmul.mubr.f32.gmra.mrb[0].mxu0 %v977
    %v1280 = vpop.f32.mrb[0].mxu0
    %v1281 = vadd.f32 %v904, %v1280
    %v1282 = vpop.f32.mrb[0].mxu0
    %1283 = vmatprep.mubr.f32.mxu0 0.0
    %1284 = vmatmul.mubr.f32.gmra.mrb[0].mxu0 %v980
    %v1285 = vpop.f32.mrb[0].mxu0
    %v1286 = vadd.f32 %v904, %v1285
    %v1287 = vpop.f32.mrb[0].mxu0
    %1288 = vmatprep.mubr.f32.mxu0 0.0
    %1289 = vmatmul.mubr.f32.gmra.mrb[0].mxu0 %v983
    %v1290 = vpop.f32.mrb[0].mxu0
    %v1291 = vadd.f32 %v904, %v1290
    %v1292 = vpop.f32.mrb[0].mxu0
    %1293 = vmatprep.mubr.f32.mxu0 0.0
    %1294 = vmatmul.mubr.f32.gmra.mrb[0].mxu0 %v986
    %v1295 = vpop.f32.mrb[0].mxu0
    %v1296 = vadd.f32 %v904, %v1295
    %v1297 = vpop.f32.mrb[0].mxu0
    %1298 = vmatprep.mubr.f32.mxu0 0.0
    %1299 = vmatmul.mubr.f32.gmra.mrb[0].mxu0 %v989
    %v1300 = vpop.f32.mrb[0].mxu0
    %v1301 = vadd.f32 %v904, %v1300
    %v1302 = vpop.f32.mrb[0].mxu0
    %1303 = vmatprep.mubr.f32.mxu0 0.0
    %1304 = vmatmul.mubr.f32.gmra.mrb[0].mxu0 %v992
    %v1305 = vpop.f32.mrb[0].mxu0
    %v1306 = vadd.f32 %v904, %v1305
    %v1307 = vpop.f32.mrb[0].mxu0
    %1308 = vmatprep.mubr.f32.mxu0 0.0
    %1309 = vmatmul.mubr.f32.gmra.mrb[0].mxu0 %v995
    %v1310 = vpop.f32.mrb[0].mxu0
    %v1311 = vadd.f32 %v904, %v1310
    %v1312 = vpop.f32.mrb[0].mxu0
    %1313 = vmatprep.mubr.f32.mxu0 0.0
    %1314 = vmatmul.mubr.f32.gmra.mrb[0].mxu0 %v998
    %v1315 = vpop.f32.mrb[0].mxu0
    %v1316 = vadd.f32 %v904, %v1315
    %v1317 = vpop.f32.mrb[0].mxu0
    %1318 = vmatprep.mubr.f32.mxu0 0.0
    %1319 = vmatmul.mubr.f32.gmra.mrb[0].mxu0 %v1001
    %v1320 = vpop.f32.mrb[0].mxu0
    %v1321 = vadd.f32 %v904, %v1320
    %v1322 = vpop.f32.mrb[0].mxu0
    %1323 = vmatprep.mubr.f32.mxu0 0.0
    %1324 = vmatmul.mubr.f32.gmra.mrb[0].mxu0 %v1004
    %v1325 = vpop.f32.mrb[0].mxu0
    %v1326 = vadd.f32 %v904, %v1325
    %v1327 = vpop.f32.mrb[0].mxu0
    %1328 = vmatprep.mubr.f32.mxu0 0.0
    %1329 = vmatmul.mubr.f32.gmra.mrb[0].mxu0 %v1007
    %v1330 = vpop.f32.mrb[0].mxu0
    %v1331 = vadd.f32 %v904, %v1330
    %v1332 = vpop.f32.mrb[0].mxu0
    %1333 = vmatprep.mubr.f32.mxu0 0.0
    %1334 = vmatmul.mubr.f32.gmra.mrb[0].mxu0 %v1010
    %v1335 = vpop.f32.mrb[0].mxu0
    %v1336 = vadd.f32 %v904, %v1335
    %v1337 = vpop.f32.mrb[0].mxu0
    %1338 = vmatprep.mubr.f32.mxu0 0.0
    %1339 = vmatmul.mubr.f32.gmra.mrb[0].mxu0 %v1013
    %v1340 = vpop.f32.mrb[0].mxu0
    %v1341 = vadd.f32 %v904, %v1340
    %v1342 = vpop.f32.mrb[0].mxu0
    %1343 = vmatprep.mubr.f32.mxu0 0.0
    %1344 = vmatmul.mubr.f32.gmra.mrb[0].mxu0 %v1016
    %v1345 = vpop.f32.mrb[0].mxu0
    %v1346 = vadd.f32 %v904, %v1345
    %v1347 = vpop.f32.mrb[0].mxu0
    %1348 = vmatprep.mubr.f32.mxu0 0.0
    %1349 = vmatmul.mubr.f32.gmra.mrb[0].mxu0 %v1019
    %v1350 = vpop.f32.mrb[0].mxu0
    %v1351 = vadd.f32 %v904, %v1350
    %v1352 = vpop.f32.mrb[0].mxu0
    %1353 = vmatprep.mubr.f32.mxu0 0.0
    %1354 = vmatmul.mubr.f32.gmra.mrb[0].mxu0 %v1022
    %v1355 = vpop.f32.mrb[0].mxu0
    %v1356 = vadd.f32 %v904, %v1355
    %v1357 = vpop.f32.mrb[0].mxu0
    %1358 = vmatprep.mubr.f32.mxu0 0.0
    %1359 = vmatmul.mubr.f32.gmra.mrb[0].mxu0 %v1025
    %v1360 = vpop.f32.mrb[0].mxu0
    %v1361 = vadd.f32 %v904, %v1360
    %v1362 = vpop.f32.mrb[0].mxu0
    %1363 = vmatprep.mubr.f32.mxu0 0.0
    %1364 = vmatmul.mubr.f32.gmra.mrb[0].mxu0 %v1028
    %v1365 = vpop.f32.mrb[0].mxu0
    %v1366 = vadd.f32 %v904, %v1365
    %v1367 = vpop.f32.mrb[0].mxu0
    %1368 = vmatprep.mubr.f32.mxu0 0.0
    %1369 = vmatmul.mubr.f32.gmra.mrb[0].mxu0 %v1031
    %v1370 = vpop.f32.mrb[0].mxu0
    %v1371 = vadd.f32 %v904, %v1370
    %v1372 = vpop.f32.mrb[0].mxu0
    %1373 = vmatprep.mubr.f32.mxu0 0.0
    %1374 = vmatmul.mubr.f32.gmra.mrb[0].mxu0 %v1034
    %v1375 = vpop.f32.mrb[0].mxu0
    %v1376 = vadd.f32 %v904, %v1375
    %v1377 = vpop.f32.mrb[0].mxu0
    %1378 = vmatprep.mubr.f32.mxu0 0.0
    %1379 = vmatmul.mubr.f32.gmra.mrb[0].mxu0 %v1037
    %v1380 = vpop.f32.mrb[0].mxu0
    %v1381 = vadd.f32 %v904, %v1380
    %v1382 = vpop.f32.mrb[0].mxu0
    %1383 = vmatprep.mubr.f32.mxu0 0.0
    %1384 = vmatmul.mubr.f32.gmra.mrb[0].mxu0 %v1040
    %v1385 = vpop.f32.mrb[0].mxu0
    %v1386 = vadd.f32 %v904, %v1385
    %v1387 = vpop.f32.mrb[0].mxu0
    %1388 = vmatprep.mubr.f32.mxu0 0.0
    %1389 = vmatmul.mubr.f32.gmra.mrb[0].mxu0 %v1043
    %v1390 = vpop.f32.mrb[0].mxu0
    %v1391 = vadd.f32 %v904, %v1390
    %v1392 = vpop.f32.mrb[0].mxu0
    %1393 = vmatprep.mubr.f32.mxu0 0.0
    %1394 = vmatmul.mubr.f32.gmra.mrb[0].mxu0 %v1046
    %v1395 = vpop.f32.mrb[0].mxu0
    %v1396 = vadd.f32 %v904, %v1395
    %v1397 = vpop.f32.mrb[0].mxu0
    %1398 = vmatprep.mubr.f32.mxu0 0.0
    %1399 = vmatmul.mubr.f32.gmra.mrb[0].mxu0 %v1049
    %v1400 = vpop.f32.mrb[0].mxu0
    %v1401 = vadd.f32 %v904, %v1400
    %v1402 = vpop.f32.mrb[0].mxu0
    %1403 = vmatprep.mubr.f32.mxu0 0.0
    %1404 = vmatmul.mubr.f32.gmra.mrb[0].mxu0 %v1052
    %v1405 = vpop.f32.mrb[0].mxu0
    %v1406 = vadd.f32 %v904, %v1405
    %v1407 = vpop.f32.mrb[0].mxu0
    %1408 = vmatprep.mubr.f32.mxu0 0.0
    %1409 = vmatmul.mubr.f32.gmra.mrb[0].mxu0 %v1055
    %v1410 = vpop.f32.mrb[0].mxu0
    %v1411 = vadd.f32 %v904, %v1410
    %v1412 = vpop.f32.mrb[0].mxu0
    %1413 = vmatprep.mubr.f32.mxu0 0.0
    %1414 = vmatmul.mubr.f32.gmra.mrb[0].mxu0 %v1058
    %v1415 = vpop.f32.mrb[0].mxu0
    %v1416 = vadd.f32 %v904, %v1415
    %v1417 = vpop.f32.mrb[0].mxu0
    %1418 = vmatprep.mubr.f32.mxu0 0.0
    %1419 = vmatmul.mubr.f32.gmra.mrb[0].mxu0 %v1061
    %v1420 = vpop.f32.mrb[0].mxu0
    %v1421 = vadd.f32 %v904, %v1420
    %v1422 = vpop.f32.mrb[0].mxu0
    %1423 = vmatprep.mubr.f32.mxu0 0.0
    %1424 = vmatmul.mubr.f32.gmra.mrb[0].mxu0 %v1064
    %v1425 = vpop.f32.mrb[0].mxu0
    %v1426 = vadd.f32 %v904, %v1425
    %v1427 = vpop.f32.mrb[0].mxu0
    %1428 = vmatprep.mubr.f32.mxu0 0.0
    %1429 = vmatmul.mubr.f32.gmra.mrb[0].mxu0 %v1067
    %v1430 = vpop.f32.mrb[0].mxu0
    %v1431 = vadd.f32 %v904, %v1430
    %v1432 = vpop.f32.mrb[0].mxu0
    %1433 = vmatprep.mubr.f32.mxu0 0.0
    %1434 = vmatmul.mubr.f32.gmra.mrb[0].mxu0 %v1070
    %v1435 = vpop.f32.mrb[0].mxu0
    %v1436 = vadd.f32 %v904, %v1435
    %v1437 = vpop.f32.mrb[0].mxu0
    %1438 = vmatprep.mubr.f32.mxu0 0.0
    %1439 = vmatmul.mubr.f32.gmra.mrb[0].mxu0 %v1073
    %v1440 = vpop.f32.mrb[0].mxu0
    %v1441 = vadd.f32 %v904, %v1440
    %v1442 = vpop.f32.mrb[0].mxu0
    %1443 = vmatprep.mubr.f32.mxu0 0.0
    %1444 = vmatmul.mubr.f32.gmra.mrb[0].mxu0 %v1076
    %v1445 = vpop.f32.mrb[0].mxu0
    %v1446 = vadd.f32 %v904, %v1445
    %v1447 = vpop.f32.mrb[0].mxu0
    %1448 = vmatprep.mubr.f32.mxu0 0.0
    %1449 = vmatmul.mubr.f32.gmra.mrb[0].mxu0 %v1079
    %v1450 = vpop.f32.mrb[0].mxu0
    %v1451 = vadd.f32 %v904, %v1450
    %v1452 = vpop.f32.mrb[0].mxu0
    %1453 = vmatprep.mubr.f32.mxu0 0.0
    %1454 = vmatmul.mubr.f32.gmra.mrb[0].mxu0 %v1082
    %v1455 = vpop.f32.mrb[0].mxu0
    %v1456 = vadd.f32 %v904, %v1455
    %v1457 = vpop.f32.mrb[0].mxu0
    %1458 = vmatprep.mubr.f32.mxu0 0.0
    %1459 = vmatmul.mubr.f32.gmra.mrb[0].mxu0 %v1085
    %v1460 = vpop.f32.mrb[0].mxu0
    %v1461 = vadd.f32 %v904, %v1460
    %v1462 = vpop.f32.mrb[0].mxu0
    %1463 = vmatprep.mubr.f32.mxu0 0.0
    %1464 = vmatmul.mubr.f32.gmra.mrb[0].mxu0 %v1088
    %v1465 = vpop.f32.mrb[0].mxu0
    %v1466 = vadd.f32 %v904, %v1465
    %v1467 = vpop.f32.mrb[0].mxu0
    %1468 = vmatprep.mubr.f32.mxu0 0.0
    %1469 = vmatmul.mubr.f32.gmra.mrb[0].mxu0 %v1091
    %v1470 = vpop.f32.mrb[0].mxu0
    %v1471 = vadd.f32 %v904, %v1470
    %v1472 = vpop.f32.mrb[0].mxu0
    %1473 = vmatprep.mubr.f32.mxu0 0.0
    %1474 = vmatmul.mubr.f32.gmra.mrb[0].mxu0 %v1094
    %v1475 = vpop.f32.mrb[0].mxu0
    %v1476 = vadd.f32 %v904, %v1475
    %v1477 = vpop.f32.mrb[0].mxu0
    %1478 = vmatprep.mubr.f32.mxu0 0.0
    %1479 = vmatmul.mubr.f32.gmra.mrb[0].mxu0 %v1097
    %v1480 = vpop.f32.mrb[0].mxu0
    %v1481 = vadd.f32 %v904, %v1480
    %v1482 = vpop.f32.mrb[0].mxu0
    %1483 = vdwg.mxu0
    %v1484 = vmax.f32 %v1166, 0.0
    %v1485 = vmax.f32 %v1171, 0.0
    %v1486 = vmax.f32 %v1176, 0.0
    %v1487 = vmax.f32 %v1181, 0.0
    %v1488 = vmax.f32 %v1186, 0.0
    %v1489 = vmax.f32 %v1191, 0.0
    %v1490 = vmax.f32 %v1196, 0.0
    %v1491 = vmax.f32 %v1201, 0.0
    %v1492 = vmax.f32 %v1206, 0.0
    %v1493 = vmax.f32 %v1211, 0.0
    %v1494 = vmax.f32 %v1216, 0.0
    %v1495 = vmax.f32 %v1221, 0.0
    %v1496 = vmax.f32 %v1226, 0.0
    %v1497 = vmax.f32 %v1231, 0.0
    %v1498 = vmax.f32 %v1236, 0.0
    %v1499 = vmax.f32 %v1241, 0.0
    %v1500 = vmax.f32 %v1246, 0.0
    %v1501 = vmax.f32 %v1251, 0.0
    %v1502 = vmax.f32 %v1256, 0.0
    %v1503 = vmax.f32 %v1261, 0.0
    %v1504 = vmax.f32 %v1266, 0.0
    %v1505 = vmax.f32 %v1271, 0.0
    %v1506 = vmax.f32 %v1276, 0.0
    %v1507 = vmax.f32 %v1281, 0.0
    %v1508 = vmax.f32 %v1286, 0.0
    %v1509 = vmax.f32 %v1291, 0.0
    %v1510 = vmax.f32 %v1296, 0.0
    %v1511 = vmax.f32 %v1301, 0.0
    %v1512 = vmax.f32 %v1306, 0.0
    %v1513 = vmax.f32 %v1311, 0.0
    %v1514 = vmax.f32 %v1316, 0.0
    %v1515 = vmax.f32 %v1321, 0.0
    %v1516 = vmax.f32 %v1326, 0.0
    %v1517 = vmax.f32 %v1331, 0.0
    %v1518 = vmax.f32 %v1336, 0.0
    %v1519 = vmax.f32 %v1341, 0.0
    %v1520 = vmax.f32 %v1346, 0.0
    %v1521 = vmax.f32 %v1351, 0.0
    %v1522 = vmax.f32 %v1356, 0.0
    %v1523 = vmax.f32 %v1361, 0.0
    %v1524 = vmax.f32 %v1366, 0.0
    %v1525 = vmax.f32 %v1371, 0.0
    %v1526 = vmax.f32 %v1376, 0.0
    %v1527 = vmax.f32 %v1381, 0.0
    %v1528 = vmax.f32 %v1386, 0.0
    %v1529 = vmax.f32 %v1391, 0.0
    %v1530 = vmax.f32 %v1396, 0.0
    %v1531 = vmax.f32 %v1401, 0.0
    %v1532 = vmax.f32 %v1406, 0.0
    %v1533 = vmax.f32 %v1411, 0.0
    %v1534 = vmax.f32 %v1416, 0.0
    %v1535 = vmax.f32 %v1421, 0.0
    %v1536 = vmax.f32 %v1426, 0.0
    %v1537 = vmax.f32 %v1431, 0.0
    %v1538 = vmax.f32 %v1436, 0.0
    %v1539 = vmax.f32 %v1441, 0.0
    %v1540 = vmax.f32 %v1446, 0.0
    %v1541 = vmax.f32 %v1451, 0.0
    %v1542 = vmax.f32 %v1456, 0.0
    %v1543 = vmax.f32 %v1461, 0.0
    %v1544 = vmax.f32 %v1466, 0.0
    %v1545 = vmax.f32 %v1471, 0.0
    %v1546 = vmax.f32 %v1476, 0.0
    %v1547 = vmax.f32 %v1481, 0.0
    %v1548 = vld [vmem:[%s8] sm:$0x1]
    %v1549 = vld [vmem:[%s2] sm:$0xf]
    %s1550 = sld [smem:[#allocation2]]
    %v1551 = vstv %s1550
    %v1552 = vmul.f32 %v1549, %v1551
    %v1554 = vlaneseq
    %v1555 = vshrl.u32 %v1554, 7
    %v1556 = vsub.s32 0, %v1555
    %v1557 = vrot.slane %v1552, %v1556
    %v1558 = vlaneseq
    %v1559 = vshrl.u32 %v1558, 7
    %v1560 = vsub.s32 1, %v1559
    %v1561 = vrot.slane %v1552, %v1560
    %v1562 = vlaneseq
    %v1563 = vshrl.u32 %v1562, 7
    %v1564 = vsub.s32 2, %v1563
    %v1565 = vrot.slane %v1552, %v1564
    %v1566 = vlaneseq
    %v1567 = vshrl.u32 %v1566, 7
    %v1568 = vsub.s32 3, %v1567
    %v1569 = vrot.slane %v1552, %v1568
    %v1575 = vsel %vm906, %v1548, 0
    %v1578 = vsel %vm906, %v1484, 0
    %v1581 = vsel %vm906, %v1485, 0
    %v1584 = vsel %vm906, %v1486, 0
    %v1587 = vsel %vm906, %v1487, 0
    %v1590 = vsel %vm906, %v1488, 0
    %v1593 = vsel %vm906, %v1489, 0
    %v1596 = vsel %vm906, %v1490, 0
    %v1599 = vsel %vm906, %v1491, 0
    %v1602 = vsel %vm906, %v1492, 0
    %v1605 = vsel %vm906, %v1493, 0
    %v1608 = vsel %vm906, %v1494, 0
    %v1611 = vsel %vm906, %v1495, 0
    %v1614 = vsel %vm906, %v1496, 0
    %v1617 = vsel %vm906, %v1497, 0
    %v1620 = vsel %vm906, %v1498, 0
    %v1623 = vsel %vm906, %v1499, 0
    %v1626 = vsel %vm906, %v1500, 0
    %v1629 = vsel %vm906, %v1501, 0
    %v1632 = vsel %vm906, %v1502, 0
    %v1635 = vsel %vm906, %v1503, 0
    %v1638 = vsel %vm906, %v1504, 0
    %v1641 = vsel %vm906, %v1505, 0
    %v1644 = vsel %vm906, %v1506, 0
    %v1647 = vsel %vm906, %v1507, 0
    %v1650 = vsel %vm906, %v1508, 0
    %v1653 = vsel %vm906, %v1509, 0
    %v1656 = vsel %vm906, %v1510, 0
    %v1659 = vsel %vm906, %v1511, 0
    %v1662 = vsel %vm906, %v1512, 0
    %v1665 = vsel %vm906, %v1513, 0
    %v1668 = vsel %vm906, %v1514, 0
    %v1671 = vsel %vm906, %v1515, 0
    %v1674 = vsel %vm906, %v1516, 0
    %v1677 = vsel %vm906, %v1517, 0
    %v1680 = vsel %vm906, %v1518, 0
    %v1683 = vsel %vm906, %v1519, 0
    %v1686 = vsel %vm906, %v1520, 0
    %v1689 = vsel %vm906, %v1521, 0
    %v1692 = vsel %vm906, %v1522, 0
    %v1695 = vsel %vm906, %v1523, 0
    %v1698 = vsel %vm906, %v1524, 0
    %v1701 = vsel %vm906, %v1525, 0
    %v1704 = vsel %vm906, %v1526, 0
    %v1707 = vsel %vm906, %v1527, 0
    %v1710 = vsel %vm906, %v1528, 0
    %v1713 = vsel %vm906, %v1529, 0
    %v1716 = vsel %vm906, %v1530, 0
    %v1719 = vsel %vm906, %v1531, 0
    %v1722 = vsel %vm906, %v1532, 0
    %v1725 = vsel %vm906, %v1533, 0
    %v1728 = vsel %vm906, %v1534, 0
    %v1731 = vsel %vm906, %v1535, 0
    %v1734 = vsel %vm906, %v1536, 0
    %v1737 = vsel %vm906, %v1537, 0
    %v1740 = vsel %vm906, %v1538, 0
    %v1743 = vsel %vm906, %v1539, 0
    %v1746 = vsel %vm906, %v1540, 0
    %v1749 = vsel %vm906, %v1541, 0
    %v1752 = vsel %vm906, %v1542, 0
    %v1755 = vsel %vm906, %v1543, 0
    %v1758 = vsel %vm906, %v1544, 0
    %v1761 = vsel %vm906, %v1545, 0
    %v1764 = vsel %vm906, %v1546, 0
    %v1767 = vsel %vm906, %v1547, 0
    %1769 = vmatprep.subr.mxu0 0.0
    %1770 = vmatpush1.xpose.msra.mxu0 %v1578
    %1771 = vmatprep.subr.mxu0 0.0
    %1772 = vmatpush1.xpose.msra.mxu0 %v1581
    %1773 = vmatprep.subr.mxu0 0.0
    %1774 = vmatpush1.xpose.msra.mxu0 %v1584
    %1775 = vmatprep.subr.mxu0 0.0
    %1776 = vmatpush1.xpose.msra.mxu0 %v1587
    %1777 = vmatprep.subr.mxu0 0.0
    %1778 = vmatpush1.xpose.msra.mxu0 %v1590
    %1779 = vmatprep.subr.mxu0 0.0
    %1780 = vmatpush1.xpose.msra.mxu0 %v1593
    %1781 = vmatprep.subr.mxu0 0.0
    %1782 = vmatpush1.xpose.msra.mxu0 %v1596
    %1783 = vmatprep.subr.mxu0 0.0
    %1784 = vmatpush1.xpose.msra.mxu0 %v1599
    %1785 = vmatprep.subr.mxu0 0.0
    %1786 = vmatpush1.xpose.msra.mxu0 %v1602
    %1787 = vmatprep.subr.mxu0 0.0
    %1788 = vmatpush1.xpose.msra.mxu0 %v1605
    %1789 = vmatprep.subr.mxu0 0.0
    %1790 = vmatpush1.xpose.msra.mxu0 %v1608
    %1791 = vmatprep.subr.mxu0 0.0
    %1792 = vmatpush1.xpose.msra.mxu0 %v1611
    %1793 = vmatprep.subr.mxu0 0.0
    %1794 = vmatpush1.xpose.msra.mxu0 %v1614
    %1795 = vmatprep.subr.mxu0 0.0
    %1796 = vmatpush1.xpose.msra.mxu0 %v1617
    %1797 = vmatprep.subr.mxu0 0.0
    %1798 = vmatpush1.xpose.msra.mxu0 %v1620
    %1799 = vmatprep.subr.mxu0 0.0
    %1800 = vmatpush1.xpose.msra.mxu0 %v1623
    %1801 = vmatprep.subr.mxu0 0.0
    %1802 = vmatpush1.xpose.msra.mxu0 %v1626
    %1803 = vmatprep.subr.mxu0 0.0
    %1804 = vmatpush1.xpose.msra.mxu0 %v1629
    %1805 = vmatprep.subr.mxu0 0.0
    %1806 = vmatpush1.xpose.msra.mxu0 %v1632
    %1807 = vmatprep.subr.mxu0 0.0
    %1808 = vmatpush1.xpose.msra.mxu0 %v1635
    %1809 = vmatprep.subr.mxu0 0.0
    %1810 = vmatpush1.xpose.msra.mxu0 %v1638
    %1811 = vmatprep.subr.mxu0 0.0
    %1812 = vmatpush1.xpose.msra.mxu0 %v1641
    %1813 = vmatprep.subr.mxu0 0.0
    %1814 = vmatpush1.xpose.msra.mxu0 %v1644
    %1815 = vmatprep.subr.mxu0 0.0
    %1816 = vmatpush1.xpose.msra.mxu0 %v1647
    %1817 = vmatprep.subr.mxu0 0.0
    %1818 = vmatpush1.xpose.msra.mxu0 %v1650
    %1819 = vmatprep.subr.mxu0 0.0
    %1820 = vmatpush1.xpose.msra.mxu0 %v1653
    %1821 = vmatprep.subr.mxu0 0.0
    %1822 = vmatpush1.xpose.msra.mxu0 %v1656
    %1823 = vmatprep.subr.mxu0 0.0
    %1824 = vmatpush1.xpose.msra.mxu0 %v1659
    %1825 = vmatprep.subr.mxu0 0.0
    %1826 = vmatpush1.xpose.msra.mxu0 %v1662
    %1827 = vmatprep.subr.mxu0 0.0
    %1828 = vmatpush1.xpose.msra.mxu0 %v1665
    %1829 = vmatprep.subr.mxu0 0.0
    %1830 = vmatpush1.xpose.msra.mxu0 %v1668
    %1831 = vmatprep.subr.mxu0 0.0
    %1832 = vmatpush1.xpose.msra.mxu0 %v1671
    %1833 = vmatprep.mubr.f32.mxu0 0.0
    %1834 = vmatmul.mubr.f32.gmra.mrb[0].mxu0 %v1575
    %v1835 = vpop.f32.mrb[0].mxu0
    %v1836 = vadd.f32 %v1557, %v1835
    %v1837 = vpop.f32.mrb[0].mxu0
    %v1838 = vadd.f32 %v1561, %v1837
    %1839 = vdwg.mxu0
    %1840 = vmatprep.subr.mxu0 0.0
    %1841 = vmatpush1.xpose.msra.mxu0 %v1674
    %1842 = vmatprep.subr.mxu0 0.0
    %1843 = vmatpush1.xpose.msra.mxu0 %v1677
    %1844 = vmatprep.subr.mxu0 0.0
    %1845 = vmatpush1.xpose.msra.mxu0 %v1680
    %1846 = vmatprep.subr.mxu0 0.0
    %1847 = vmatpush1.xpose.msra.mxu0 %v1683
    %1848 = vmatprep.subr.mxu0 0.0
    %1849 = vmatpush1.xpose.msra.mxu0 %v1686
    %1850 = vmatprep.subr.mxu0 0.0
    %1851 = vmatpush1.xpose.msra.mxu0 %v1689
    %1852 = vmatprep.subr.mxu0 0.0
    %1853 = vmatpush1.xpose.msra.mxu0 %v1692
    %1854 = vmatprep.subr.mxu0 0.0
    %1855 = vmatpush1.xpose.msra.mxu0 %v1695
    %1856 = vmatprep.subr.mxu0 0.0
    %1857 = vmatpush1.xpose.msra.mxu0 %v1698
    %1858 = vmatprep.subr.mxu0 0.0
    %1859 = vmatpush1.xpose.msra.mxu0 %v1701
    %1860 = vmatprep.subr.mxu0 0.0
    %1861 = vmatpush1.xpose.msra.mxu0 %v1704
    %1862 = vmatprep.subr.mxu0 0.0
    %1863 = vmatpush1.xpose.msra.mxu0 %v1707
    %1864 = vmatprep.subr.mxu0 0.0
    %1865 = vmatpush1.xpose.msra.mxu0 %v1710
    %1866 = vmatprep.subr.mxu0 0.0
    %1867 = vmatpush1.xpose.msra.mxu0 %v1713
    %1868 = vmatprep.subr.mxu0 0.0
    %1869 = vmatpush1.xpose.msra.mxu0 %v1716
    %1870 = vmatprep.subr.mxu0 0.0
    %1871 = vmatpush1.xpose.msra.mxu0 %v1719
    %1872 = vmatprep.subr.mxu0 0.0
    %1873 = vmatpush1.xpose.msra.mxu0 %v1722
    %1874 = vmatprep.subr.mxu0 0.0
    %1875 = vmatpush1.xpose.msra.mxu0 %v1725
    %1876 = vmatprep.subr.mxu0 0.0
    %1877 = vmatpush1.xpose.msra.mxu0 %v1728
    %1878 = vmatprep.subr.mxu0 0.0
    %1879 = vmatpush1.xpose.msra.mxu0 %v1731
    %1880 = vmatprep.subr.mxu0 0.0
    %1881 = vmatpush1.xpose.msra.mxu0 %v1734
    %1882 = vmatprep.subr.mxu0 0.0
    %1883 = vmatpush1.xpose.msra.mxu0 %v1737
    %1884 = vmatprep.subr.mxu0 0.0
    %1885 = vmatpush1.xpose.msra.mxu0 %v1740
    %1886 = vmatprep.subr.mxu0 0.0
    %1887 = vmatpush1.xpose.msra.mxu0 %v1743
    %1888 = vmatprep.subr.mxu0 0.0
    %1889 = vmatpush1.xpose.msra.mxu0 %v1746
    %1890 = vmatprep.subr.mxu0 0.0
    %1891 = vmatpush1.xpose.msra.mxu0 %v1749
    %1892 = vmatprep.subr.mxu0 0.0
    %1893 = vmatpush1.xpose.msra.mxu0 %v1752
    %1894 = vmatprep.subr.mxu0 0.0
    %1895 = vmatpush1.xpose.msra.mxu0 %v1755
    %1896 = vmatprep.subr.mxu0 0.0
    %1897 = vmatpush1.xpose.msra.mxu0 %v1758
    %1898 = vmatprep.subr.mxu0 0.0
    %1899 = vmatpush1.xpose.msra.mxu0 %v1761
    %1900 = vmatprep.subr.mxu0 0.0
    %1901 = vmatpush1.xpose.msra.mxu0 %v1764
    %1902 = vmatprep.subr.mxu0 0.0
    %1903 = vmatpush1.xpose.msra.mxu0 %v1767
    %1904 = vmatprep.mubr.f32.mxu0 0.0
    %1905 = vmatmul.mubr.f32.gmra.mrb[0].mxu0 %v1575
    %v1906 = vpop.f32.mrb[0].mxu0
    %v1907 = vadd.f32 %v1565, %v1906
    %v1908 = vpop.f32.mrb[0].mxu0
    %v1909 = vadd.f32 %v1569, %v1908
    %1910 = vdwg.mxu0
    %s1911 = sld [smem:[#allocation2 + $0x1]]
    %v1912 = vstv %s1911
    %v1913 = vadd.f32 %v1836, %v1912
    %v1914 = vadd.f32 %v1838, %v1912
    %v1915 = vadd.f32 %v1907, %v1912
    %v1916 = vadd.f32 %v1909, %v1912
    %v1917 = vxor.u32 %v1913, 2147483648
    %v1918 = vxor.u32 %v1914, 2147483648
    %v1919 = vxor.u32 %v1915, 2147483648
    %v1920 = vxor.u32 %v1916, 2147483648
    %v1921 = vmul.f32 %v1917, 1.442695
    %v1922 = vpow.pop %v1921
    %v1923 = vmul.f32 %v1918, 1.442695
    %v1924 = vpow.pop %v1923
    %v1925 = vmul.f32 %v1919, 1.442695
    %v1926 = vpow.pop %v1925
    %v1927 = vmul.f32 %v1920, 1.442695
    %v1928 = vpow.pop %v1927
    %v1929 = vadd.f32 %v1922, 1.0
    %v1930 = vadd.f32 %v1924, 1.0
    %v1931 = vadd.f32 %v1926, 1.0
    %v1932 = vadd.f32 %v1928, 1.0
    %v1933 = vrcp.pop %v1929
    %v1934 = vmul.f32 1.0, %v1933
    %v1935 = vrcp.pop %v1930
    %v1936 = vmul.f32 1.0, %v1935
    %v1937 = vrcp.pop %v1931
    %v1938 = vmul.f32 1.0, %v1937
    %v1939 = vrcp.pop %v1932
    %v1940 = vmul.f32 1.0, %v1939
    %v1945 = vcombine.low %v1934, %v1936
    %v1946 = vcombine.low %v1938, %v1940
    %v1948 = vunpack.c.l.s4 1966171168
    %v1949 = vunpack.c.0.s8 %v1948
    %v1950 = vlaneseq
    %v1951 = vshrl.u32 %v1950, 7
    %v1952 = vsub.s32 %v1949, %v1951
    %v1953 = vrot.slane %v1945, %v1952
    %v1955 = vunpack.c.l.s4 1966171168
    %v1956 = vunpack.c.0.s8 %v1955
    %v1957 = vlaneseq
    %v1958 = vshrl.u32 %v1957, 7
    %v1959 = vsub.s32 %v1956, %v1958
    %v1960 = vrot.slane %v1946, %v1959
    %v1961 = vcombine.low %v1953, %v1960
    %v1963 = vunpack.c.l.s4 1966171168
    %v1964 = vunpack.c.0.s8 %v1963
    %v1965 = vlaneseq
    %v1966 = vshrl.u32 %v1965, 7
    %v1967 = vsub.s32 %v1964, %v1966
    %v1968 = vrot.slane %v1961, %v1967
    %v1970 = vlaneseq
    %vm1971 = vcmp.ge.s32.totalorder %v1970, 0
    %vm1972 = vcmp.lt.s32.totalorder %v1970, 512
    %vm1973 = vmand %vm1971, %vm1972
    %1974 = vst.msk [vmem:[#allocation5] sm:$0xf] %vm1973, %v1968
    // Predicated region
    $region42: #{tpu_custom_call.1} parent=1 // pred_check
      _
    $region43: #{tpu_custom_call.1} parent=1 // pred_check_branch
      %1976 = sbr.rel (0) target = $region45
    $region44: #{tpu_custom_call.1} parent=1 // pred_region
      %s1978 = ssub.s32 64, 64
      %1979 = vsyncadd [#allocation3], %s1978
      %s1981 = sshll.u32 [#allocation5], 4
      %s1982 = int_to_ptr.vmem [resolvable:$true] %s1981
      %1984 = dma.vmem_to_hbm [thread:$0]  %s1982, 64, %s9, [#allocation3]
    $region45: #{tpu_custom_call.1} parent=1 // pred_fallthru
      _
    // Predicated region
    $region46: #{tpu_custom_call.1} parent=1 // pred_check
      _
    $region47: #{tpu_custom_call.1} parent=1 // pred_check_branch
      %1986 = sbr.rel (0) target = $region49
    $region48: #{tpu_custom_call.1} parent=1 // pred_region
      %1987 = dma.done [#allocation3], 64
    $region49: #{tpu_custom_call.1} parent=1 // pred_fallthru
      _
    %1988 = vsyncpa [#allocation3], 1
    %1989 = vsyncpa [#allocation4], 1

</llo_original>
